<compile_context>
chip_gen: v7x
topology: tpu7x:2x2x1
jax: 0.10.0
libtpu: 0.0.40
codegen_flags: <defaults>
</compile_context>

<pallas_src>
import math
import functools
import numpy as np

import jax
import jax.numpy as jnp
from jax import lax
from jax.experimental import pallas as pl
from jax.experimental.pallas import tpu as pltpu


_NEG_INF = -1e30


def _vmem_limit_bytes():
    cap = 64 * 1024 * 1024
    try:
        info = pltpu.get_tpu_info()
        cap = int(getattr(info, "vmem_capacity_bytes", cap))
    except Exception:
        pass
    # Leave headroom for compiler-internal scratch; ~100 MiB on v5e/v6e, ~56 MiB on v7x.
    return min(100 * 1024 * 1024, (cap // 8) * 7)


def _pick_tile(n, candidates):
    for t in candidates:
        if n % t == 0:
            return t
    return n


# --------------------------------------------------------------------------------------
# Kernel 1: GroupNorm(32, C) + 1x1 qkv conv, one batch element per grid step.
# --------------------------------------------------------------------------------------
def _gn_qkv_kernel(x_ref, gmat_ref, gmat_t_ref, gnw_ref, gnb_ref, qkvw_ref, qkvb_ref,
                   qkv_ref, *, t_valid, eps, inv_n):
    xb = x_ref[0].astype(jnp.float32)                                  # (C, Tp)
    c, t_pad = xb.shape

    # GroupNorm stats: lane reductions first, then tiny (G,C)x(C,1) / (C,G)x(G,1) matmuls (fp32).
    row_sum = jnp.sum(xb, axis=1, keepdims=True)                       # (C, 1)
    mean_g = jnp.dot(gmat_ref[...], row_sum,
                     preferred_element_type=jnp.float32) * inv_n       # (G, 1)
    mean_c = jnp.dot(gmat_t_ref[...], mean_g,
                     preferred_element_type=jnp.float32)               # (C, 1)
    centered = xb - mean_c
    sq = centered * centered
    if t_valid != t_pad:                                               # mask padded lanes
        lane = lax.broadcasted_iota(jnp.int32, sq.shape, 1)
        sq = jnp.where(lane < t_valid, sq, 0.0)
    row_sq = jnp.sum(sq, axis=1, keepdims=True)                        # (C, 1)
    var_g = jnp.dot(gmat_ref[...], row_sq,
                    preferred_element_type=jnp.float32) * inv_n        # (G, 1)
    var_c = jnp.dot(gmat_t_ref[...], var_g,
                    preferred_element_type=jnp.float32)                # (C, 1)
    xn = centered * lax.rsqrt(var_c + eps) * gnw_ref[...] + gnb_ref[...]

    # qkv = Conv1d(C, 3C, 1)(xn) == W @ xn + b  (bf16 MXU operands, fp32 accumulate).
    qkv = jnp.dot(qkvw_ref[...], xn.astype(qkvw_ref.dtype),
                  preferred_element_type=jnp.float32) + qkvb_ref[...]
    qkv_ref[0] = qkv.astype(qkv_ref.dtype)


# --------------------------------------------------------------------------------------
# Kernel 2: QKVAttentionLegacy, flash-style online softmax over key tiles.
# Grid = (batch, head, q_tile, k_tile); k_tile is the innermost ("arbitrary") reduction axis.
# Scores are oriented (tk, tq) so both matmuls contract existing axes (no transposes).
# --------------------------------------------------------------------------------------
def _flash_attn_kernel(q_ref, k_ref, v_ref, o_ref, m_scr, l_scr, acc_scr,
                       *, t_valid, t_pad, tk, scale):
    ki = pl.program_id(3)

    @pl.when(ki == 0)
    def _init():
        m_scr[...] = jnp.full_like(m_scr, _NEG_INF)
        l_scr[...] = jnp.zeros_like(l_scr)
        acc_scr[...] = jnp.zeros_like(acc_scr)

    # Scale applied once to q (scale = 1/sqrt(ch) == (ch**-0.25)**2), then bf16 MXU operands.
    q = (q_ref[0].astype(jnp.float32) * scale).astype(jnp.bfloat16)    # (ch, tq)
    k = k_ref[0].astype(jnp.bfloat16)                                  # (ch, tk)
    s = lax.dot_general(k, q, dimension_numbers=(((0,), (0,)), ((), ())),
                        preferred_element_type=jnp.float32)            # (tk, tq)
    if t_valid != t_pad:                                               # mask padded keys
        key_idx = ki * tk + lax.broadcasted_iota(jnp.int32, s.shape, 0)
        s = jnp.where(key_idx < t_valid, s, _NEG_INF)

    m_prev = m_scr[...]                                                # (1, tq)
    m_new = jnp.maximum(m_prev, jnp.max(s, axis=0, keepdims=True))
    alpha = jnp.exp(m_prev - m_new)                                    # (1, tq)
    p = jnp.exp(s - m_new)                                             # (tk, tq)
    l_scr[...] = alpha * l_scr[...] + jnp.sum(p, axis=0, keepdims=True)
    v = v_ref[0].astype(jnp.bfloat16)                                  # (ch, tk)
    acc_scr[...] = alpha * acc_scr[...] + jnp.dot(
        v, p.astype(jnp.bfloat16), preferred_element_type=jnp.float32)  # (ch, tq)
    m_scr[...] = m_new

    @pl.when(ki == pl.num_programs(3) - 1)
    def _finalize():
        o_ref[0] = (acc_scr[...] *
                    pl.reciprocal(l_scr[...], approx=True)).astype(o_ref.dtype)


# --------------------------------------------------------------------------------------
# Kernel 3: proj_out (1x1 conv) + residual, lane-tiled over T.
# --------------------------------------------------------------------------------------
def _proj_residual_kernel(x_ref, a_ref, projw_ref, projb_ref, y_ref):
    a = a_ref[0].astype(projw_ref.dtype)                               # (C, tn)
    h = jnp.dot(projw_ref[...], a, preferred_element_type=jnp.float32) + projb_ref[...]
    y_ref[0] = (x_ref[0].astype(jnp.float32) + h).astype(y_ref.dtype)


# --------------------------------------------------------------------------------------
# Wrapper
# --------------------------------------------------------------------------------------
def attention_block_ref_forward(x, params, *, num_heads, num_groups=32, eps=1e-5,
                                compute_dtype=jnp.bfloat16):
    """x: [B, C, *spatial]. Returns (y [B, C, *spatial], qkv [B, 3C, T])."""
    b, c, *spatial = x.shape
    t = int(np.prod(spatial))
    assert c % num_groups == 0, "GroupNorm requires channels % num_groups == 0"
    assert c % num_heads == 0, "channels must be divisible by num_heads"
    ch = c // num_heads
    assert ch % 8 == 0, "head channels must be a multiple of 8 (sublane alignment)"
    cg = c // num_groups

    # Lane-dense layout: pad flattened spatial dim to a multiple of 128.
    t_pad = ((t + 127) // 128) * 128
    x2 = x.reshape(b, c, t)
    if t_pad != t:
        x2 = jnp.pad(x2, ((0, 0), (0, 0), (0, t_pad - t)))

    # Group membership matrices (and transpose) built host-side: no in-kernel transposes.
    ch_ids = jnp.arange(c) // cg
    gmat = (ch_ids[None, :] == jnp.arange(num_groups)[:, None]).astype(jnp.float32)  # (G, C)
    gmat_t = gmat.T                                                                   # (C, G)

    gnw = params["gn_weight"].astype(jnp.float32).reshape(c, 1)
    gnb = params["gn_bias"].astype(jnp.float32).reshape(c, 1)
    qkvw = params["qkv_w"].astype(compute_dtype)                 # (3C, C), bf16 MXU operand
    qkvb = params["qkv_b"].astype(jnp.float32).reshape(3 * c, 1)
    projw = params["proj_w"].astype(compute_dtype)               # (C, C),  bf16 MXU operand
    projb = params["proj_b"].astype(jnp.float32).reshape(c, 1)

    vmem_limit = _vmem_limit_bytes()

    # ---- kernel 1: GroupNorm + qkv conv ----
    k1 = functools.partial(_gn_qkv_kernel, t_valid=t, eps=eps, inv_n=1.0 / float(cg * t))
    qkv = pl.pallas_call(
        k1,
        out_shape=jax.ShapeDtypeStruct((b, 3 * c, t_pad), x.dtype),
        grid=(b,),
        in_specs=[
            pl.BlockSpec((1, c, t_pad), lambda i: (i, 0, 0)),
            pl.BlockSpec((num_groups, c), lambda i: (0, 0)),
            pl.BlockSpec((c, num_groups), lambda i: (0, 0)),
            pl.BlockSpec((c, 1), lambda i: (0, 0)),
            pl.BlockSpec((c, 1), lambda i: (0, 0)),
            pl.BlockSpec((3 * c, c), lambda i: (0, 0)),
            pl.BlockSpec((3 * c, 1), lambda i: (0, 0)),
        ],
        out_specs=pl.BlockSpec((1, 3 * c, t_pad), lambda i: (i, 0, 0)),
        compiler_params=pltpu.CompilerParams(
            dimension_semantics=("parallel",), vmem_limit_bytes=vmem_limit),
    )(x2, gmat, gmat_t, gnw, gnb, qkvw, qkvb)
    # TODO(synk): for very large C*T, the GN+qkv stage should also be T-tiled with a two-pass
    # statistics reduction; here one (C, Tp) block per batch element is kept resident.

    # ---- kernel 2: flash-style legacy QKV attention ----
    tq = _pick_tile(t_pad, (256, 128))
    tk = _pick_tile(t_pad, (256, 128))
    attn_dtype = compute_dtype if (ch % 16 == 0) else jnp.float32
    k2 = functools.partial(_flash_attn_kernel, t_valid=t, t_pad=t_pad, tk=tk,
                           scale=1.0 / math.sqrt(ch))
    attn = pl.pallas_call(
        k2,
        out_shape=jax.ShapeDtypeStruct((b, c, t_pad), attn_dtype),
        grid=(b, num_heads, t_pad // tq, t_pad // tk),
        in_specs=[
            pl.BlockSpec((1, ch, tq), lambda bi, hi, qi, ki: (bi, 3 * hi, qi)),
            pl.BlockSpec((1, ch, tk), lambda bi, hi, qi, ki: (bi, 3 * hi + 1, ki)),
            pl.BlockSpec((1, ch, tk), lambda bi, hi, qi, ki: (bi, 3 * hi + 2, ki)),
        ],
        out_specs=pl.BlockSpec((1, ch, tq), lambda bi, hi, qi, ki: (bi, hi, qi)),
        scratch_shapes=[
            pltpu.VMEM((1, tq), jnp.float32),    # running max  m
            pltpu.VMEM((1, tq), jnp.float32),    # running sum  l
            pltpu.VMEM((ch, tq), jnp.float32),   # output accumulator
        ],
        compiler_params=pltpu.CompilerParams(
            dimension_semantics=("parallel", "parallel", "parallel", "arbitrary"),
            vmem_limit_bytes=vmem_limit),
    )(qkv, qkv, qkv)

    # ---- kernel 3: proj_out + residual ----
    tn = _pick_tile(t_pad, (512, 256, 128))
    y = pl.pallas_call(
        _proj_residual_kernel,
        out_shape=jax.ShapeDtypeStruct((b, c, t_pad), x.dtype),
        grid=(b, t_pad // tn),
        in_specs=[
            pl.BlockSpec((1, c, tn), lambda bi, ji: (bi, 0, ji)),
            pl.BlockSpec((1, c, tn), lambda bi, ji: (bi, 0, ji)),
            pl.BlockSpec((c, c), lambda bi, ji: (0, 0)),
            pl.BlockSpec((c, 1), lambda bi, ji: (0, 0)),
        ],
        out_specs=pl.BlockSpec((1, c, tn), lambda bi, ji: (bi, 0, ji)),
        compiler_params=pltpu.CompilerParams(
            dimension_semantics=("parallel", "parallel"), vmem_limit_bytes=vmem_limit),
    )(x2, attn, projw, projb)

    if t_pad != t:
        y = y[:, :, :t]
        qkv = qkv[:, :, :t]
    return y.reshape(b, c, *spatial), qkv


# --------------------------------------------------------------------------------------
# Pure-JAX fp32 reference (mirrors the PyTorch forward)
# --------------------------------------------------------------------------------------
def reference_forward(x, params, *, num_heads, num_groups=32, eps=1e-5):
    b, c, *spatial = x.shape
    T = int(np.prod(spatial))
    x2 = x.reshape(b, c, T).astype(jnp.float32)

    xg = x2.reshape(b, num_groups, c // num_groups, T)
    mean = xg.mean(axis=(2, 3), keepdims=True)
    var = ((xg - mean) ** 2).mean(axis=(2, 3), keepdims=True)
    xn = ((xg - mean) / jnp.sqrt(var + eps)).reshape(b, c, T)
    xn = xn * params["gn_weight"][None, :, None] + params["gn_bias"][None, :, None]

    qkv = jnp.einsum("oc,bct->bot", params["qkv_w"], xn) + params["qkv_b"][None, :, None]

    ch = c // num_heads
    scale = 1.0 / math.sqrt(math.sqrt(ch))
    qkv_h = qkv.reshape(b * num_heads, 3 * ch, T)
    q, k, v = qkv_h[:, :ch], qkv_h[:, ch: 2 * ch], qkv_h[:, 2 * ch:]
    w = jnp.einsum("bct,bcs->bts", q * scale, k * scale)
    w = w - w.max(axis=-1, keepdims=True)
    w = jnp.exp(w)
    w = w / w.sum(axis=-1, keepdims=True)
    a = jnp.einsum("bts,bcs->bct", w, v).reshape(b, c, T)

    h = jnp.einsum("oc,bct->bot", params["proj_w"], a) + params["proj_b"][None, :, None]
    y = (x2 + h).reshape(b, c, *spatial)
    return y, qkv


def make_params(key, channels):
    """Deterministic synthetic params matching the module's __init__ shapes."""
    k1, k2 = jax.random.split(key)
    c = channels
    bound = 1.0 / math.sqrt(c)  # PyTorch Conv1d(C, 3C, 1) default uniform bound
    qkv_w = jax.random.uniform(k1, (3 * c, c), jnp.float32, minval=-bound, maxval=bound)
    qkv_b = jax.random.uniform(k2, (3 * c,), jnp.float32, minval=-bound, maxval=bound)
    return {
        "gn_weight": jnp.ones((c,), jnp.float32),   # GroupNorm affine defaults
        "gn_bias": jnp.zeros((c,), jnp.float32),
        "qkv_w": qkv_w,
        "qkv_b": qkv_b,
        "proj_w": jnp.zeros((c, c), jnp.float32),   # zero_module(Conv1d(C, C, 1))
        "proj_b": jnp.zeros((c,), jnp.float32),
    }


if __name__ == "__main__":
    NUM_HEADS = 2        # num_head_channels = 32
    NUM_GROUPS = 32
    ATOL = RTOL = 2.5e-2  # bf16 MXU operands vs fp32 reference

    key = jax.random.PRNGKey(0)
    kx1, kp1, kx2, kp2, kw, kb = jax.random.split(key, 6)

    # Case 1: lane-aligned T (16x16=256), default module params (zero-initialized proj_out).
    B, C, H, W = 2, 64, 16, 16
    x1 = jax.random.normal(kx1, (B, C, H, W), jnp.float32)
    params1 = make_params(kp1, C)
    y1, qkv1 = attention_block_ref_forward(x1, params1, num_heads=NUM_HEADS, num_groups=NUM_GROUPS)
    y1 = jax.block_until_ready(y1)
    qkv1 = jax.block_until_ready(qkv1)
    y1_ref, qkv1_ref = reference_forward(x1, params1, num_heads=NUM_HEADS, num_groups=NUM_GROUPS)
    np.testing.assert_allclose(np.asarray(qkv1), np.asarray(qkv1_ref), atol=ATOL, rtol=RTOL)
    np.testing.assert_allclose(np.asarray(y1), np.asarray(y1_ref), atol=ATOL, rtol=RTOL)

    # Case 2: non-128-aligned T (8x8=64, padded/masked internally), non-zero proj weights.
    B2, C2, H2, W2 = 1, 64, 8, 8
    x2_in = jax.random.normal(kx2, (B2, C2, H2, W2), jnp.float32)
    params2 = dict(make_params(kp2, C2))
    params2["proj_w"] = jax.random.uniform(kw, (C2, C2), jnp.float32, minval=-0.125, maxval=0.125)
    params2["proj_b"] = jax.random.uniform(kb, (C2,), jnp.float32, minval=-0.125, maxval=0.125)
    y2, qkv2 = attention_block_ref_forward(x2_in, params2, num_heads=NUM_HEADS, num_groups=NUM_GROUPS)
    y2 = jax.block_until_ready(y2)
    qkv2 = jax.block_until_ready(qkv2)
    y2_ref, qkv2_ref = reference_forward(x2_in, params2, num_heads=NUM_HEADS, num_groups=NUM_GROUPS)
    np.testing.assert_allclose(np.asarray(qkv2), np.asarray(qkv2_ref), atol=ATOL, rtol=RTOL)
    np.testing.assert_allclose(np.asarray(y2), np.asarray(y2_ref), atol=ATOL, rtol=RTOL)

    print("KERNEL_OK")
</pallas_src>

<mosaic_0001>
module attributes {stable_mosaic.version = 11 : i64} {
  func.func @_gn_qkv_kernel(%arg0: i32, %arg1: memref<1x64x256xf32, #tpu.memory_space<vmem>>, %arg2: memref<32x64xf32, #tpu.memory_space<vmem>>, %arg3: memref<64x32xf32, #tpu.memory_space<vmem>>, %arg4: memref<64x1xf32, #tpu.memory_space<vmem>>, %arg5: memref<64x1xf32, #tpu.memory_space<vmem>>, %arg6: memref<192x64xbf16, #tpu.memory_space<vmem>>, %arg7: memref<192x1xf32, #tpu.memory_space<vmem>>, %arg8: memref<1x192x256xf32, #tpu.memory_space<vmem>>) attributes {dimension_semantics = [#tpu.dimension_semantics<parallel>], iteration_bounds = array<i64: 2>, scalar_prefetch = 0 : i64, scratch_operands = 0 : i64, tpu.core_type = #tpu.core_type<tc>, window_params = [{transform_indices = @transform_0, window_bounds = array<i64: 1, 64, 256>}, {pipeline_mode = #tpu.pipeline_mode<synchronous>, transform_indices = @transform_1, window_bounds = array<i64: 32, 64>}, {pipeline_mode = #tpu.pipeline_mode<synchronous>, transform_indices = @transform_2, window_bounds = array<i64: 64, 32>}, {pipeline_mode = #tpu.pipeline_mode<synchronous>, transform_indices = @transform_3, window_bounds = array<i64: 64, 1>}, {pipeline_mode = #tpu.pipeline_mode<synchronous>, transform_indices = @transform_4, window_bounds = array<i64: 64, 1>}, {pipeline_mode = #tpu.pipeline_mode<synchronous>, transform_indices = @transform_5, window_bounds = array<i64: 192, 64>}, {pipeline_mode = #tpu.pipeline_mode<synchronous>, transform_indices = @transform_6, window_bounds = array<i64: 192, 1>}, {transform_indices = @transform_7, window_bounds = array<i64: 1, 192, 256>}]} {
    %c0 = arith.constant 0 : index
    %c0_0 = arith.constant 0 : index
    %c0_1 = arith.constant 0 : index
    %0 = vector.load %arg1[%c0, %c0_0, %c0_1] : memref<1x64x256xf32, #tpu.memory_space<vmem>>, vector<1x64x256xf32>
    %1 = vector.shape_cast %0 : vector<1x64x256xf32> to vector<64x256xf32>
    %cst = arith.constant dense<0.000000e+00> : vector<64xf32>
    %2 = vector.multi_reduction <add>, %1, %cst [1] : vector<64x256xf32> to vector<64xf32>
    %3 = vector.shape_cast %2 : vector<64xf32> to vector<64x1xf32>
    %c0_2 = arith.constant 0 : index
    %c0_3 = arith.constant 0 : index
    %4 = vector.load %arg2[%c0_2, %c0_3] : memref<32x64xf32, #tpu.memory_space<vmem>>, vector<32x64xf32>
    %cst_4 = arith.constant dense<0.000000e+00> : vector<32x1xf32>
    %5 = tpu.matmul %4, %3, %cst_4 {dimension_numbers = #tpu.dot_dimension_numbers<[1], [0], [0], [1], [0, 0, 1, 1], [], []>} : vector<32x64xf32>, vector<64x1xf32>, vector<32x1xf32> -> vector<32x1xf32>
    %cst_5 = arith.constant 0.001953125 : f32
    %6 = vector.broadcast %cst_5 : f32 to vector<32x1xf32>
    %7 = arith.mulf %5, %6 : vector<32x1xf32>
    %c0_6 = arith.constant 0 : index
    %c0_7 = arith.constant 0 : index
    %8 = vector.load %arg3[%c0_6, %c0_7] : memref<64x32xf32, #tpu.memory_space<vmem>>, vector<64x32xf32>
    %cst_8 = arith.constant dense<0.000000e+00> : vector<64x1xf32>
    %9 = tpu.matmul %8, %7, %cst_8 {dimension_numbers = #tpu.dot_dimension_numbers<[1], [0], [0], [1], [0, 0, 1, 1], [], []>} : vector<64x32xf32>, vector<32x1xf32>, vector<64x1xf32> -> vector<64x1xf32>
    %10 = vector.broadcast %9 : vector<64x1xf32> to vector<64x256xf32>
    %11 = arith.subf %1, %10 : vector<64x256xf32>
    %12 = arith.mulf %11, %11 : vector<64x256xf32>
    %cst_9 = arith.constant dense<0.000000e+00> : vector<64xf32>
    %13 = vector.multi_reduction <add>, %12, %cst_9 [1] : vector<64x256xf32> to vector<64xf32>
    %14 = vector.shape_cast %13 : vector<64xf32> to vector<64x1xf32>
    %c0_10 = arith.constant 0 : index
    %c0_11 = arith.constant 0 : index
    %15 = vector.load %arg2[%c0_10, %c0_11] : memref<32x64xf32, #tpu.memory_space<vmem>>, vector<32x64xf32>
    %cst_12 = arith.constant dense<0.000000e+00> : vector<32x1xf32>
    %16 = tpu.matmul %15, %14, %cst_12 {dimension_numbers = #tpu.dot_dimension_numbers<[1], [0], [0], [1], [0, 0, 1, 1], [], []>} : vector<32x64xf32>, vector<64x1xf32>, vector<32x1xf32> -> vector<32x1xf32>
    %cst_13 = arith.constant 0.001953125 : f32
    %17 = vector.broadcast %cst_13 : f32 to vector<32x1xf32>
    %18 = arith.mulf %16, %17 : vector<32x1xf32>
    %c0_14 = arith.constant 0 : index
    %c0_15 = arith.constant 0 : index
    %19 = vector.load %arg3[%c0_14, %c0_15] : memref<64x32xf32, #tpu.memory_space<vmem>>, vector<64x32xf32>
    %cst_16 = arith.constant dense<0.000000e+00> : vector<64x1xf32>
    %20 = tpu.matmul %19, %18, %cst_16 {dimension_numbers = #tpu.dot_dimension_numbers<[1], [0], [0], [1], [0, 0, 1, 1], [], []>} : vector<64x32xf32>, vector<32x1xf32>, vector<64x1xf32> -> vector<64x1xf32>
    %cst_17 = arith.constant 9.99999974E-6 : f32
    %21 = vector.broadcast %cst_17 : f32 to vector<64x1xf32>
    %22 = arith.addf %20, %21 : vector<64x1xf32>
    %23 = math.rsqrt %22 : vector<64x1xf32>
    %24 = vector.broadcast %23 : vector<64x1xf32> to vector<64x256xf32>
    %25 = arith.mulf %11, %24 : vector<64x256xf32>
    %c0_18 = arith.constant 0 : index
    %c0_19 = arith.constant 0 : index
    %26 = vector.load %arg4[%c0_18, %c0_19] : memref<64x1xf32, #tpu.memory_space<vmem>>, vector<64x1xf32>
    %27 = vector.broadcast %26 : vector<64x1xf32> to vector<64x256xf32>
    %28 = arith.mulf %25, %27 : vector<64x256xf32>
    %c0_20 = arith.constant 0 : index
    %c0_21 = arith.constant 0 : index
    %29 = vector.load %arg5[%c0_20, %c0_21] : memref<64x1xf32, #tpu.memory_space<vmem>>, vector<64x1xf32>
    %30 = vector.broadcast %29 : vector<64x1xf32> to vector<64x256xf32>
    %31 = arith.addf %28, %30 : vector<64x256xf32>
    %c0_22 = arith.constant 0 : index
    %c0_23 = arith.constant 0 : index
    %32 = vector.load %arg6[%c0_22, %c0_23] : memref<192x64xbf16, #tpu.memory_space<vmem>>, vector<192x64xbf16>
    %33 = arith.truncf %31 : vector<64x256xf32> to vector<64x256xbf16>
    %cst_24 = arith.constant dense<0.000000e+00> : vector<192x256xf32>
    %34 = tpu.matmul %32, %33, %cst_24 {dimension_numbers = #tpu.dot_dimension_numbers<[1], [0], [0], [1], [0, 0, 1, 1], [], []>} : vector<192x64xbf16>, vector<64x256xbf16>, vector<192x256xf32> -> vector<192x256xf32>
    %c0_25 = arith.constant 0 : index
    %c0_26 = arith.constant 0 : index
    %35 = vector.load %arg7[%c0_25, %c0_26] : memref<192x1xf32, #tpu.memory_space<vmem>>, vector<192x1xf32>
    %36 = vector.broadcast %35 : vector<192x1xf32> to vector<192x256xf32>
    %37 = arith.addf %34, %36 : vector<192x256xf32>
    %c0_27 = arith.constant 0 : index
    %c0_28 = arith.constant 0 : index
    %c0_29 = arith.constant 0 : index
    %38 = vector.load %arg8[%c0_27, %c0_28, %c0_29] : memref<1x192x256xf32, #tpu.memory_space<vmem>>, vector<1x192x256xf32>
    %39 = vector.shape_cast %38 : vector<1x192x256xf32> to vector<192x256xf32>
    %40 = vector.shape_cast %37 : vector<192x256xf32> to vector<1x192x256xf32>
    tpu.vector_store %arg8[%c0_27, %c0_28, %c0_29], %40 {strides = array<i32>} : memref<1x192x256xf32, #tpu.memory_space<vmem>>, vector<1x192x256xf32>,
    return
  }
  func.func @transform_0(%arg0: i32) -> (i32, i32, i32) {
    %c0_i32 = arith.constant 0 : i32
    %c0_i32_0 = arith.constant 0 : i32
    %c0_i32_1 = arith.constant 0 : i32
    return %arg0, %c0_i32, %c0_i32_0 : i32, i32, i32
  }
  func.func @transform_1(%arg0: i32) -> (i32, i32) {
    %c0_i32 = arith.constant 0 : i32
    %c0_i32_0 = arith.constant 0 : i32
    %c0_i32_1 = arith.constant 0 : i32
    return %c0_i32, %c0_i32_0 : i32, i32
  }
  func.func @transform_2(%arg0: i32) -> (i32, i32) {
    %c0_i32 = arith.constant 0 : i32
    %c0_i32_0 = arith.constant 0 : i32
    %c0_i32_1 = arith.constant 0 : i32
    return %c0_i32, %c0_i32_0 : i32, i32
  }
  func.func @transform_3(%arg0: i32) -> (i32, i32) {
    %c0_i32 = arith.constant 0 : i32
    %c0_i32_0 = arith.constant 0 : i32
    %c0_i32_1 = arith.constant 0 : i32
    return %c0_i32, %c0_i32_0 : i32, i32
  }
  func.func @transform_4(%arg0: i32) -> (i32, i32) {
    %c0_i32 = arith.constant 0 : i32
    %c0_i32_0 = arith.constant 0 : i32
    %c0_i32_1 = arith.constant 0 : i32
    return %c0_i32, %c0_i32_0 : i32, i32
  }
  func.func @transform_5(%arg0: i32) -> (i32, i32) {
    %c0_i32 = arith.constant 0 : i32
    %c0_i32_0 = arith.constant 0 : i32
    %c0_i32_1 = arith.constant 0 : i32
    return %c0_i32, %c0_i32_0 : i32, i32
  }
  func.func @transform_6(%arg0: i32) -> (i32, i32) {
    %c0_i32 = arith.constant 0 : i32
    %c0_i32_0 = arith.constant 0 : i32
    %c0_i32_1 = arith.constant 0 : i32
    return %c0_i32, %c0_i32_0 : i32, i32
  }
  func.func @transform_7(%arg0: i32) -> (i32, i32, i32) {
    %c0_i32 = arith.constant 0 : i32
    %c0_i32_0 = arith.constant 0 : i32
    %c0_i32_1 = arith.constant 0 : i32
    return %arg0, %c0_i32, %c0_i32_0 : i32, i32, i32
  }
}

</mosaic_0001>

<llo_original>
// kernel: tpu_custom_call.1
$region0: #{tpu_custom_call.1}
  #allocation0 [shape = 'u32[]', space=smem, size = 0x4, offset = 0x4, fixed_abs, tag = 'smem constant byte address 0x4 - core index']
  #allocation1 [shape = 'u32[144,128]{1,0:T(1,128)}', space=vmem, size = 0x12000, scoped, tag = 'internal scratch']
  %s0 = inlined_call_operand.vmem [shape: f32[2,64,256], index: 0, kind: input, shape index: {}]
  %s1 = inlined_call_operand.vmem [shape: f32[32,64], index: 1, kind: input, shape index: {}]
  %s2 = inlined_call_operand.vmem [shape: f32[64,32], index: 2, kind: input, shape index: {}]
  %s3 = inlined_call_operand.vmem [shape: f32[64,1], index: 3, kind: input, shape index: {}]
  %s4 = inlined_call_operand.vmem [shape: f32[64,1], index: 4, kind: input, shape index: {}]
  %s5 = inlined_call_operand.vmem [shape: bf16[192,64], index: 5, kind: input, shape index: {}]
  %s6 = inlined_call_operand.vmem [shape: f32[192,1], index: 6, kind: input, shape index: {}]
  %s7 = inlined_call_operand.hbm [shape: f32[2,192,256], index: 7, kind: output, shape index: {}]
  %s8 = sld [smem:[#allocation0]]
  $region61: #{tpu_custom_call.1} parent=0
    _
  %s10 = ssub.s32 1, %s8
  %s11 = scalar_select 0, %s10, %s8
  $region1: #{tpu_custom_call.1} parent=0
    #allocation2 [shape = 'u8[393216]{0}', space=vmem, size = 0x60000, scoped, tag = 'output window, operand 0']
    #allocation3 [shape = 's32[2]{0}', space=sflag, size = 0x8, scoped, tag = 'scoped memory for tpu_custom_call.1']
    %12 = vsyncpa [#allocation3], 0
    %s13 = scalar_lea.sflag [#allocation3], 1
    %14 = vsyncpa %s13, 0
    loop: start=0, step=1, limit=4
    $region2: #{tpu_custom_call.1} parent=1 // loop_pre_header
      _
    $region3: #{tpu_custom_call.1} parent=1 // loop_header
      %s16 = sphi 0, %s20
      %p17 = scmp.ge.s32.totalorder %s16, 4
      %s26 = sphi 0, %s28
      %s29 = sphi 0, %s26
      %s30 = sphi 0, %s29
      %s46 = sphi 0, %s30
      %s50 = sphi 0, %s50
      %s52 = sphi 0, %s50
      %s53 = sphi 0, %s52
      %s67 = sphi 0, %s53
      %s71 = sphi 0, %s71
      %s73 = sphi 0, %s71
      %s74 = sphi 0, %s73
      %s88 = sphi 0, %s74
      %s92 = sphi 0, %s92
      %s94 = sphi 0, %s92
      %s95 = sphi 0, %s94
      %s109 = sphi 0, %s95
      %s113 = sphi 0, %s113
      %s115 = sphi 0, %s113
      %s116 = sphi 0, %s115
      %s130 = sphi 0, %s116
      %s134 = sphi 0, %s134
      %s136 = sphi 0, %s134
      %s137 = sphi 0, %s136
      %s151 = sphi 0, %s137
      %s155 = sphi 0, %s155
      %s157 = sphi 0, %s155
      %s158 = sphi 0, %s157
      %s172 = sphi 0, %s158
      %s178 = sphi 0, %s180
      %s181 = sphi 0, %s178
      %s182 = sphi 0, %s181
      %s198 = sphi 0, %s182
    $region4: #{tpu_custom_call.1} parent=1 // loop_header_branch
      %19 = sbr.rel (%p17) target = $region8
    $region5: #{tpu_custom_call.1} parent=1 // loop_body
      %s21 = ssub.s32 %s16, 1
      %s22 = ssub.s32 %s16, 2
      %s23 = sadd.s32 %s16, 1
      %s24 = ssub.s32 %s16, %s23
      %p25 = scmp.eq.s32.totalorder %s24, 0
      %s27 = sadd.s32 %s26, 1
      %s28 = scalar_select %p25, %s26, %s27
      %p31 = pneg %p25
      %p32 = scmp.eq.s32.totalorder %s16, 1
      %p33 = por %p31, %p32
      %p34 = scmp.ne.s32.totalorder %s26, %s29
      %p35 = scmp.eq.s32.totalorder %s16, 0
      %p36 = por %p34, %p35
      %p37 = scmp.ne.s32.totalorder %s26, %s29
      %p38 = scmp.eq.s32.totalorder %s21, 1
      %p39 = por %p37, %p38
      %p40 = scmp.ne.s32.totalorder %s29, %s30
      %p41 = scmp.eq.s32.totalorder %s21, 0
      %p42 = por %p40, %p41
      %p43 = scmp.ne.s32.totalorder %s29, %s30
      %p44 = scmp.eq.s32.totalorder %s22, 1
      %p45 = por %p43, %p44
      %p47 = scmp.ne.s32.totalorder %s30, %s46
      %p48 = scmp.eq.s32.totalorder %s22, 0
      %p49 = por %p47, %p48
      %s51 = sadd.s32 %s50, 1
      %p54 = scmp.eq.s32.totalorder %s16, 1
      %p55 = scmp.ne.s32.totalorder %s50, %s52
      %p56 = scmp.eq.s32.totalorder %s16, 0
      %p57 = por %p55, %p56
      %p58 = scmp.ne.s32.totalorder %s50, %s52
      %p59 = scmp.eq.s32.totalorder %s21, 1
      %p60 = por %p58, %p59
      %p61 = scmp.ne.s32.totalorder %s52, %s53
      %p62 = scmp.eq.s32.totalorder %s21, 0
      %p63 = por %p61, %p62
      %p64 = scmp.ne.s32.totalorder %s52, %s53
      %p65 = scmp.eq.s32.totalorder %s22, 1
      %p66 = por %p64, %p65
      %p68 = scmp.ne.s32.totalorder %s53, %s67
      %p69 = scmp.eq.s32.totalorder %s22, 0
      %p70 = por %p68, %p69
      %s72 = sadd.s32 %s71, 1
      %p75 = scmp.eq.s32.totalorder %s16, 1
      %p76 = scmp.ne.s32.totalorder %s71, %s73
      %p77 = scmp.eq.s32.totalorder %s16, 0
      %p78 = por %p76, %p77
      %p79 = scmp.ne.s32.totalorder %s71, %s73
      %p80 = scmp.eq.s32.totalorder %s21, 1
      %p81 = por %p79, %p80
      %p82 = scmp.ne.s32.totalorder %s73, %s74
      %p83 = scmp.eq.s32.totalorder %s21, 0
      %p84 = por %p82, %p83
      %p85 = scmp.ne.s32.totalorder %s73, %s74
      %p86 = scmp.eq.s32.totalorder %s22, 1
      %p87 = por %p85, %p86
      %p89 = scmp.ne.s32.totalorder %s74, %s88
      %p90 = scmp.eq.s32.totalorder %s22, 0
      %p91 = por %p89, %p90
      %s93 = sadd.s32 %s92, 1
      %p96 = scmp.eq.s32.totalorder %s16, 1
      %p97 = scmp.ne.s32.totalorder %s92, %s94
      %p98 = scmp.eq.s32.totalorder %s16, 0
      %p99 = por %p97, %p98
      %p100 = scmp.ne.s32.totalorder %s92, %s94
      %p101 = scmp.eq.s32.totalorder %s21, 1
      %p102 = por %p100, %p101
      %p103 = scmp.ne.s32.totalorder %s94, %s95
      %p104 = scmp.eq.s32.totalorder %s21, 0
      %p105 = por %p103, %p104
      %p106 = scmp.ne.s32.totalorder %s94, %s95
      %p107 = scmp.eq.s32.totalorder %s22, 1
      %p108 = por %p106, %p107
      %p110 = scmp.ne.s32.totalorder %s95, %s109
      %p111 = scmp.eq.s32.totalorder %s22, 0
      %p112 = por %p110, %p111
      %s114 = sadd.s32 %s113, 1
      %p117 = scmp.eq.s32.totalorder %s16, 1
      %p118 = scmp.ne.s32.totalorder %s113, %s115
      %p119 = scmp.eq.s32.totalorder %s16, 0
      %p120 = por %p118, %p119
      %p121 = scmp.ne.s32.totalorder %s113, %s115
      %p122 = scmp.eq.s32.totalorder %s21, 1
      %p123 = por %p121, %p122
      %p124 = scmp.ne.s32.totalorder %s115, %s116
      %p125 = scmp.eq.s32.totalorder %s21, 0
      %p126 = por %p124, %p125
      %p127 = scmp.ne.s32.totalorder %s115, %s116
      %p128 = scmp.eq.s32.totalorder %s22, 1
      %p129 = por %p127, %p128
      %p131 = scmp.ne.s32.totalorder %s116, %s130
      %p132 = scmp.eq.s32.totalorder %s22, 0
      %p133 = por %p131, %p132
      %s135 = sadd.s32 %s134, 1
      %p138 = scmp.eq.s32.totalorder %s16, 1
      %p139 = scmp.ne.s32.totalorder %s134, %s136
      %p140 = scmp.eq.s32.totalorder %s16, 0
      %p141 = por %p139, %p140
      %p142 = scmp.ne.s32.totalorder %s134, %s136
      %p143 = scmp.eq.s32.totalorder %s21, 1
      %p144 = por %p142, %p143
      %p145 = scmp.ne.s32.totalorder %s136, %s137
      %p146 = scmp.eq.s32.totalorder %s21, 0
      %p147 = por %p145, %p146
      %p148 = scmp.ne.s32.totalorder %s136, %s137
      %p149 = scmp.eq.s32.totalorder %s22, 1
      %p150 = por %p148, %p149
      %p152 = scmp.ne.s32.totalorder %s137, %s151
      %p153 = scmp.eq.s32.totalorder %s22, 0
      %p154 = por %p152, %p153
      %s156 = sadd.s32 %s155, 1
      %p159 = scmp.eq.s32.totalorder %s16, 1
      %p160 = scmp.ne.s32.totalorder %s155, %s157
      %p161 = scmp.eq.s32.totalorder %s16, 0
      %p162 = por %p160, %p161
      %p163 = scmp.ne.s32.totalorder %s155, %s157
      %p164 = scmp.eq.s32.totalorder %s21, 1
      %p165 = por %p163, %p164
      %p166 = scmp.ne.s32.totalorder %s157, %s158
      %p167 = scmp.eq.s32.totalorder %s21, 0
      %p168 = por %p166, %p167
      %p169 = scmp.ne.s32.totalorder %s157, %s158
      %p170 = scmp.eq.s32.totalorder %s22, 1
      %p171 = por %p169, %p170
      %p173 = scmp.ne.s32.totalorder %s158, %s172
      %p174 = scmp.eq.s32.totalorder %s22, 0
      %p175 = por %p173, %p174
      %s176 = ssub.s32 %s16, %s23
      %p177 = scmp.eq.s32.totalorder %s176, 0
      %s179 = sadd.s32 %s178, 1
      %s180 = scalar_select %p177, %s178, %s179
      %p183 = pneg %p177
      %p184 = scmp.eq.s32.totalorder %s16, 1
      %p185 = por %p183, %p184
      %p186 = scmp.ne.s32.totalorder %s178, %s181
      %p187 = scmp.eq.s32.totalorder %s16, 0
      %p188 = por %p186, %p187
      %p189 = scmp.ne.s32.totalorder %s178, %s181
      %p190 = scmp.eq.s32.totalorder %s21, 1
      %p191 = por %p189, %p190
      %p192 = scmp.ne.s32.totalorder %s181, %s182
      %p193 = scmp.eq.s32.totalorder %s21, 0
      %p194 = por %p192, %p193
      %p195 = scmp.ne.s32.totalorder %s181, %s182
      %p196 = scmp.eq.s32.totalorder %s22, 1
      %p197 = por %p195, %p196
      %p199 = scmp.ne.s32.totalorder %s182, %s198
      %p200 = scmp.eq.s32.totalorder %s22, 0
      %p201 = por %p199, %p200
      %p202 = scmp.le.s32.totalorder 1, %s16
      %p203 = scmp.lt.s32.totalorder %s16, 3
      %p204 = pnand %p202, %p203
      %p205 = pneg %p204
      // Predicated region
      $region9: #{tpu_custom_call.1} parent=5 // pred_check
        _
      $region10: #{tpu_custom_call.1} parent=5 // pred_check_branch
        %207 = sbr.rel (%p204) target = $region12
      $region11: #{tpu_custom_call.1} parent=5 // pred_region
        %s208 = ssub.s32 %s16, 1
        // Predicated region
        $region13: #{tpu_custom_call.1} parent=11 // pred_check
          %p209 = pneg %p63
        $region14: #{tpu_custom_call.1} parent=11 // pred_check_branch
          %211 = sbr.rel (%p209) target = $region16
        $region15: #{tpu_custom_call.1} parent=11 // pred_region
          _
        $region16: #{tpu_custom_call.1} parent=11 // pred_fallthru
          _
        // Predicated region
        $region17: #{tpu_custom_call.1} parent=11 // pred_check
          %p212 = pneg %p84
        $region18: #{tpu_custom_call.1} parent=11 // pred_check_branch
          %214 = sbr.rel (%p212) target = $region20
        $region19: #{tpu_custom_call.1} parent=11 // pred_region
          _
        $region20: #{tpu_custom_call.1} parent=11 // pred_fallthru
          _
        // Predicated region
        $region21: #{tpu_custom_call.1} parent=11 // pred_check
          %p215 = pneg %p105
        $region22: #{tpu_custom_call.1} parent=11 // pred_check_branch
          %217 = sbr.rel (%p215) target = $region24
        $region23: #{tpu_custom_call.1} parent=11 // pred_region
          _
        $region24: #{tpu_custom_call.1} parent=11 // pred_fallthru
          _
        // Predicated region
        $region25: #{tpu_custom_call.1} parent=11 // pred_check
          %p218 = pneg %p126
        $region26: #{tpu_custom_call.1} parent=11 // pred_check_branch
          %220 = sbr.rel (%p218) target = $region28
        $region27: #{tpu_custom_call.1} parent=11 // pred_region
          _
        $region28: #{tpu_custom_call.1} parent=11 // pred_fallthru
          _
        // Predicated region
        $region29: #{tpu_custom_call.1} parent=11 // pred_check
          %p221 = pneg %p147
        $region30: #{tpu_custom_call.1} parent=11 // pred_check_branch
          %223 = sbr.rel (%p221) target = $region32
        $region31: #{tpu_custom_call.1} parent=11 // pred_region
          _
        $region32: #{tpu_custom_call.1} parent=11 // pred_fallthru
          _
        // Predicated region
        $region33: #{tpu_custom_call.1} parent=11 // pred_check
          %p224 = pneg %p168
        $region34: #{tpu_custom_call.1} parent=11 // pred_check_branch
          %226 = sbr.rel (%p224) target = $region36
        $region35: #{tpu_custom_call.1} parent=11 // pred_region
          _
        $region36: #{tpu_custom_call.1} parent=11 // pred_fallthru
          _
      $region12: #{tpu_custom_call.1} parent=5 // pred_fallthru
        _
      %p227 = scmp.lt.s32.totalorder %s16, 2
      // Predicated region
      $region37: #{tpu_custom_call.1} parent=5 // pred_check
        %p228 = pneg %p227
      $region38: #{tpu_custom_call.1} parent=5 // pred_check_branch
        %230 = sbr.rel (%p228) target = $region40
      $region39: #{tpu_custom_call.1} parent=5 // pred_region
        // Predicated region
        $region41: #{tpu_custom_call.1} parent=39 // pred_check
          %p231 = pneg %p36
        $region42: #{tpu_custom_call.1} parent=39 // pred_check_branch
          %233 = sbr.rel (%p231) target = $region44
        $region43: #{tpu_custom_call.1} parent=39 // pred_region
          %p234 = scmp.lt.s32.totalorder %s16, 1
          %s235 = scalar_select %p234, %s16, 1
          %s236 = smul.addr %s235, 16
          %s237 = smul.addr %s236, 8
          %s238 = scalar_lea.vmem %s0, %s237
        $region44: #{tpu_custom_call.1} parent=39 // pred_fallthru
          _
      $region40: #{tpu_custom_call.1} parent=5 // pred_fallthru
        _
      %p239 = scmp.le.s32.totalorder 1, %s16
      %p240 = scmp.lt.s32.totalorder %s16, 3
      %p241 = pnand %p239, %p240
      %p242 = pneg %p241
      // Predicated region
      $region45: #{tpu_custom_call.1} parent=5 // pred_check
        _
      $region46: #{tpu_custom_call.1} parent=5 // pred_check_branch
        %244 = sbr.rel (%p241) target = $region48
      $region47: #{tpu_custom_call.1} parent=5 // pred_region
        %s245 = ssub.s32 %s16, 1
        %p246 = scmp.lt.s32.totalorder %s21, 1
        %s247 = scalar_select %p246, %s21, 1
        %s248 = smul.addr %s247, 16
        %s249 = smul.addr %s248, 8
        %s250 = scalar_lea.vmem %s0, %s249
        %p251 = pneg %p42
        %p252 = pneg %p39
        %p253 = pneg %p63
        %p254 = pneg %p60
        %p255 = pneg %p84
        %p256 = pneg %p81
        %p257 = pneg %p105
        %p258 = pneg %p102
        %p259 = pneg %p126
        %p260 = pneg %p123
        %p261 = pneg %p147
        %p262 = pneg %p144
        %p263 = pneg %p168
        %p264 = pneg %p165
        %p265 = pneg %p194
        %p266 = pneg %p191
        %s267 = sand.u32 %s181, 1
        %s268 = scalar_lea.sflag [#allocation3], %s267
        %s269 = sand.u32 %s181, 1
        %s270 = smul.addr %s269, 384
        %s271 = scalar_lea.vmem [#allocation2], %s270
        %p272 = scmp.lt.s32.totalorder %s21, 1
        %s273 = scalar_select %p272, %s21, 1
        %s274 = smul.addr %s273, 16
        %s275 = smul.addr %s274, 8
        %s276 = scalar_lea.vmem %s0, %s275
        %v278 = vld [vmem:[%s276] sm:$0xff]
        %v279 = vld [vmem:[%s276 + $0x8] sm:$0xff]
        %v280 = vld [vmem:[%s276 + $0x10] sm:$0xff]
        %v281 = vld [vmem:[%s276 + $0x18] sm:$0xff]
        %v282 = vld [vmem:[%s276 + $0x20] sm:$0xff]
        %v283 = vld [vmem:[%s276 + $0x28] sm:$0xff]
        %v284 = vld [vmem:[%s276 + $0x30] sm:$0xff]
        %v285 = vld [vmem:[%s276 + $0x38] sm:$0xff]
        %v286 = vld [vmem:[%s276 + $0x40] sm:$0xff]
        %v287 = vld [vmem:[%s276 + $0x48] sm:$0xff]
        %v288 = vld [vmem:[%s276 + $0x50] sm:$0xff]
        %v289 = vld [vmem:[%s276 + $0x58] sm:$0xff]
        %v290 = vld [vmem:[%s276 + $0x60] sm:$0xff]
        %v291 = vld [vmem:[%s276 + $0x68] sm:$0xff]
        %v292 = vld [vmem:[%s276 + $0x70] sm:$0xff]
        %v293 = vld [vmem:[%s276 + $0x78] sm:$0xff]
        %v294 = vadd.f32 %v278, %v279
        %295 = vadd.xlane.f32.xlu0 %v294
        %v296 = vpop.xlane.xlu0 %295
        %v297 = vadd.f32 %v280, %v281
        %298 = vadd.xlane.f32.xlu0 %v297
        %v299 = vpop.xlane.xlu0 %298
        %v300 = vadd.f32 %v282, %v283
        %301 = vadd.xlane.f32.xlu0 %v300
        %v302 = vpop.xlane.xlu0 %301
        %v303 = vadd.f32 %v284, %v285
        %304 = vadd.xlane.f32.xlu0 %v303
        %v305 = vpop.xlane.xlu0 %304
        %v306 = vadd.f32 %v286, %v287
        %307 = vadd.xlane.f32.xlu0 %v306
        %v308 = vpop.xlane.xlu0 %307
        %v309 = vadd.f32 %v288, %v289
        %310 = vadd.xlane.f32.xlu0 %v309
        %v311 = vpop.xlane.xlu0 %310
        %v312 = vadd.f32 %v290, %v291
        %313 = vadd.xlane.f32.xlu0 %v312
        %v314 = vpop.xlane.xlu0 %313
        %v315 = vadd.f32 %v292, %v293
        %316 = vadd.xlane.f32.xlu0 %v315
        %v317 = vpop.xlane.xlu0 %316
        %v318 = vld [vmem:[%s1] sm:$0xff]
        %v319 = vld [vmem:[%s1 + $0x8] sm:$0xff]
        %v320 = vld [vmem:[%s1 + $0x10] sm:$0xff]
        %v321 = vld [vmem:[%s1 + $0x18] sm:$0xff]
        %vm322 = vcmask 523264
        %v324 = vsel %vm322, %v318, 0
        %v327 = vsel %vm322, %v319, 0
        %v330 = vsel %vm322, %v320, 0
        %v333 = vsel %vm322, %v321, 0
        %335 = vmatprep.subr.mxu0 0.0
        %336 = vmatpush1.msra.mxu0 %v296
        %337 = vmatprep.subr.mxu0 0.0
        %338 = vmatpush1.msra.mxu0 %v299
        %339 = vmatprep.subr.mxu0 0.0
        %340 = vmatpush1.msra.mxu0 %v302
        %341 = vmatprep.subr.mxu0 0.0
        %342 = vmatpush1.msra.mxu0 %v305
        %343 = vmatprep.subr.mxu0 0.0
        %344 = vmatpush1.msra.mxu0 %v308
        %345 = vmatprep.subr.mxu0 0.0
        %346 = vmatpush1.msra.mxu0 %v311
        %347 = vmatprep.subr.mxu0 0.0
        %348 = vmatpush1.msra.mxu0 %v314
        %349 = vmatprep.subr.mxu0 0.0
        %350 = vmatpush1.msra.mxu0 %v317
        %351 = vmatprep.subr.mxu0 0.0
        %352 = vmatpush1.msra.mxu0 0.0
        %353 = vmatprep.subr.mxu0 0.0
        %354 = vmatpush1.msra.mxu0 0.0
        %355 = vmatprep.subr.mxu0 0.0
        %356 = vmatpush1.msra.mxu0 0.0
        %357 = vmatprep.subr.mxu0 0.0
        %358 = vmatpush1.msra.mxu0 0.0
        %359 = vmatprep.subr.mxu0 0.0
        %360 = vmatpush1.msra.mxu0 0.0
        %361 = vmatprep.subr.mxu0 0.0
        %362 = vmatpush1.msra.mxu0 0.0
        %363 = vmatprep.subr.mxu0 0.0
        %364 = vmatpush1.msra.mxu0 0.0
        %365 = vmatprep.subr.mxu0 0.0
        %366 = vmatpush1.msra.mxu0 0.0
        %367 = vmatprep.subr.mxu0 0.0
        %368 = vmatpush1.msra.mxu0 0.0
        %369 = vmatprep.subr.mxu0 0.0
        %370 = vmatpush1.msra.mxu0 0.0
        %371 = vmatprep.subr.mxu0 0.0
        %372 = vmatpush1.msra.mxu0 0.0
        %373 = vmatprep.subr.mxu0 0.0
        %374 = vmatpush1.msra.mxu0 0.0
        %375 = vmatprep.subr.mxu0 0.0
        %376 = vmatpush1.msra.mxu0 0.0
        %377 = vmatprep.subr.mxu0 0.0
        %378 = vmatpush1.msra.mxu0 0.0
        %379 = vmatprep.subr.mxu0 0.0
        %380 = vmatpush1.msra.mxu0 0.0
        %381 = vmatprep.subr.mxu0 0.0
        %382 = vmatpush1.msra.mxu0 0.0
        %383 = vmatprep.subr.mxu0 0.0
        %384 = vmatpush1.msra.mxu0 0.0
        %385 = vmatprep.subr.mxu0 0.0
        %386 = vmatpush1.msra.mxu0 0.0
        %387 = vmatprep.subr.mxu0 0.0
        %388 = vmatpush1.msra.mxu0 0.0
        %389 = vmatprep.subr.mxu0 0.0
        %390 = vmatpush1.msra.mxu0 0.0
        %391 = vmatprep.subr.mxu0 0.0
        %392 = vmatpush1.msra.mxu0 0.0
        %393 = vmatprep.subr.mxu0 0.0
        %394 = vmatpush1.msra.mxu0 0.0
        %395 = vmatprep.subr.mxu0 0.0
        %396 = vmatpush1.msra.mxu0 0.0
        %397 = vmatprep.subr.mxu0 0.0
        %398 = vmatpush1.msra.mxu0 0.0
        %399 = vmatprep.mubr.f32.mxu0 0.0
        %400 = vmatmul.mubr.f32.gmra.mrb[0].mxu0 %v324
        %v401 = vpop.f32.mrb[0].mxu0
        %v402 = vadd.f32 0.0, %v401
        %v403 = vpop.f32.mrb[0].mxu0
        %404 = vmatprep.mubr.f32.mxu0 0.0
        %405 = vmatmul.mubr.f32.gmra.mrb[0].mxu0 %v327
        %v406 = vpop.f32.mrb[0].mxu0
        %v407 = vadd.f32 0.0, %v406
        %v408 = vpop.f32.mrb[0].mxu0
        %409 = vmatprep.mubr.f32.mxu0 0.0
        %410 = vmatmul.mubr.f32.gmra.mrb[0].mxu0 %v330
        %v411 = vpop.f32.mrb[0].mxu0
        %v412 = vadd.f32 0.0, %v411
        %v413 = vpop.f32.mrb[0].mxu0
        %414 = vmatprep.mubr.f32.mxu0 0.0
        %415 = vmatmul.mubr.f32.gmra.mrb[0].mxu0 %v333
        %v416 = vpop.f32.mrb[0].mxu0
        %v417 = vadd.f32 0.0, %v416
        %v418 = vpop.f32.mrb[0].mxu0
        %419 = vdwg.mxu0
        %v420 = vmul.f32 %v402, 0.001953125
        %v421 = vmul.f32 %v407, 0.001953125
        %v422 = vmul.f32 %v412, 0.001953125
        %v423 = vmul.f32 %v417, 0.001953125
        %v424 = vld [vmem:[%s2] sm:$0xff]
        %v425 = vld [vmem:[%s2 + $0x8] sm:$0xff]
        %v426 = vld [vmem:[%s2 + $0x10] sm:$0xff]
        %v427 = vld [vmem:[%s2 + $0x18] sm:$0xff]
        %v428 = vld [vmem:[%s2 + $0x20] sm:$0xff]
        %v429 = vld [vmem:[%s2 + $0x28] sm:$0xff]
        %v430 = vld [vmem:[%s2 + $0x30] sm:$0xff]
        %v431 = vld [vmem:[%s2 + $0x38] sm:$0xff]
        %vm432 = vcmask 261120
        %v434 = vsel %vm432, %v424, 0
        %v437 = vsel %vm432, %v425, 0
        %v440 = vsel %vm432, %v426, 0
        %v443 = vsel %vm432, %v427, 0
        %v446 = vsel %vm432, %v428, 0
        %v449 = vsel %vm432, %v429, 0
        %v452 = vsel %vm432, %v430, 0
        %v455 = vsel %vm432, %v431, 0
        %457 = vmatprep.subr.mxu0 0.0
        %458 = vmatpush1.msra.mxu0 %v420
        %459 = vmatprep.subr.mxu0 0.0
        %460 = vmatpush1.msra.mxu0 %v421
        %461 = vmatprep.subr.mxu0 0.0
        %462 = vmatpush1.msra.mxu0 %v422
        %463 = vmatprep.subr.mxu0 0.0
        %464 = vmatpush1.msra.mxu0 %v423
        %465 = vmatprep.subr.mxu0 0.0
        %466 = vmatpush1.msra.mxu0 0.0
        %467 = vmatprep.subr.mxu0 0.0
        %468 = vmatpush1.msra.mxu0 0.0
        %469 = vmatprep.subr.mxu0 0.0
        %470 = vmatpush1.msra.mxu0 0.0
        %471 = vmatprep.subr.mxu0 0.0
        %472 = vmatpush1.msra.mxu0 0.0
        %473 = vmatprep.subr.mxu0 0.0
        %474 = vmatpush1.msra.mxu0 0.0
        %475 = vmatprep.subr.mxu0 0.0
        %476 = vmatpush1.msra.mxu0 0.0
        %477 = vmatprep.subr.mxu0 0.0
        %478 = vmatpush1.msra.mxu0 0.0
        %479 = vmatprep.subr.mxu0 0.0
        %480 = vmatpush1.msra.mxu0 0.0
        %481 = vmatprep.subr.mxu0 0.0
        %482 = vmatpush1.msra.mxu0 0.0
        %483 = vmatprep.subr.mxu0 0.0
        %484 = vmatpush1.msra.mxu0 0.0
        %485 = vmatprep.subr.mxu0 0.0
        %486 = vmatpush1.msra.mxu0 0.0
        %487 = vmatprep.subr.mxu0 0.0
        %488 = vmatpush1.msra.mxu0 0.0
        %489 = vmatprep.subr.mxu0 0.0
        %490 = vmatpush1.msra.mxu0 0.0
        %491 = vmatprep.subr.mxu0 0.0
        %492 = vmatpush1.msra.mxu0 0.0
        %493 = vmatprep.subr.mxu0 0.0
        %494 = vmatpush1.msra.mxu0 0.0
        %495 = vmatprep.subr.mxu0 0.0
        %496 = vmatpush1.msra.mxu0 0.0
        %497 = vmatprep.subr.mxu0 0.0
        %498 = vmatpush1.msra.mxu0 0.0
        %499 = vmatprep.subr.mxu0 0.0
        %500 = vmatpush1.msra.mxu0 0.0
        %501 = vmatprep.subr.mxu0 0.0
        %502 = vmatpush1.msra.mxu0 0.0
        %503 = vmatprep.subr.mxu0 0.0
        %504 = vmatpush1.msra.mxu0 0.0
        %505 = vmatprep.subr.mxu0 0.0
        %506 = vmatpush1.msra.mxu0 0.0
        %507 = vmatprep.subr.mxu0 0.0
        %508 = vmatpush1.msra.mxu0 0.0
        %509 = vmatprep.subr.mxu0 0.0
        %510 = vmatpush1.msra.mxu0 0.0
        %511 = vmatprep.subr.mxu0 0.0
        %512 = vmatpush1.msra.mxu0 0.0
        %513 = vmatprep.subr.mxu0 0.0
        %514 = vmatpush1.msra.mxu0 0.0
        %515 = vmatprep.subr.mxu0 0.0
        %516 = vmatpush1.msra.mxu0 0.0
        %517 = vmatprep.subr.mxu0 0.0
        %518 = vmatpush1.msra.mxu0 0.0
        %519 = vmatprep.subr.mxu0 0.0
        %520 = vmatpush1.msra.mxu0 0.0
        %521 = vmatprep.mubr.f32.mxu0 0.0
        %522 = vmatmul.mubr.f32.gmra.mrb[0].mxu0 %v434
        %v523 = vpop.f32.mrb[0].mxu0
        %v524 = vadd.f32 0.0, %v523
        %v525 = vpop.f32.mrb[0].mxu0
        %526 = vmatprep.mubr.f32.mxu0 0.0
        %527 = vmatmul.mubr.f32.gmra.mrb[0].mxu0 %v437
        %v528 = vpop.f32.mrb[0].mxu0
        %v529 = vadd.f32 0.0, %v528
        %v530 = vpop.f32.mrb[0].mxu0
        %531 = vmatprep.mubr.f32.mxu0 0.0
        %532 = vmatmul.mubr.f32.gmra.mrb[0].mxu0 %v440
        %v533 = vpop.f32.mrb[0].mxu0
        %v534 = vadd.f32 0.0, %v533
        %v535 = vpop.f32.mrb[0].mxu0
        %536 = vmatprep.mubr.f32.mxu0 0.0
        %537 = vmatmul.mubr.f32.gmra.mrb[0].mxu0 %v443
        %v538 = vpop.f32.mrb[0].mxu0
        %v539 = vadd.f32 0.0, %v538
        %v540 = vpop.f32.mrb[0].mxu0
        %541 = vmatprep.mubr.f32.mxu0 0.0
        %542 = vmatmul.mubr.f32.gmra.mrb[0].mxu0 %v446
        %v543 = vpop.f32.mrb[0].mxu0
        %v544 = vadd.f32 0.0, %v543
        %v545 = vpop.f32.mrb[0].mxu0
        %546 = vmatprep.mubr.f32.mxu0 0.0
        %547 = vmatmul.mubr.f32.gmra.mrb[0].mxu0 %v449
        %v548 = vpop.f32.mrb[0].mxu0
        %v549 = vadd.f32 0.0, %v548
        %v550 = vpop.f32.mrb[0].mxu0
        %551 = vmatprep.mubr.f32.mxu0 0.0
        %552 = vmatmul.mubr.f32.gmra.mrb[0].mxu0 %v452
        %v553 = vpop.f32.mrb[0].mxu0
        %v554 = vadd.f32 0.0, %v553
        %v555 = vpop.f32.mrb[0].mxu0
        %556 = vmatprep.mubr.f32.mxu0 0.0
        %557 = vmatmul.mubr.f32.gmra.mrb[0].mxu0 %v455
        %v558 = vpop.f32.mrb[0].mxu0
        %v559 = vadd.f32 0.0, %v558
        %v560 = vpop.f32.mrb[0].mxu0
        %561 = vdwg.mxu0
        %563 = vset.pattern.permute.xlu0 0
        %564 = vperm.xlu0 %563, %v524
        %v565 = vpop.permute.xlu0 %564
        %568 = vset.pattern.permute.xlu0 0
        %569 = vperm.xlu0 %568, %v529
        %v570 = vpop.permute.xlu0 %569
        %573 = vset.pattern.permute.xlu0 0
        %574 = vperm.xlu0 %573, %v534
        %v575 = vpop.permute.xlu0 %574
        %578 = vset.pattern.permute.xlu0 0
        %579 = vperm.xlu0 %578, %v539
        %v580 = vpop.permute.xlu0 %579
        %583 = vset.pattern.permute.xlu0 0
        %584 = vperm.xlu0 %583, %v544
        %v585 = vpop.permute.xlu0 %584
        %588 = vset.pattern.permute.xlu0 0
        %589 = vperm.xlu0 %588, %v549
        %v590 = vpop.permute.xlu0 %589
        %593 = vset.pattern.permute.xlu0 0
        %594 = vperm.xlu0 %593, %v554
        %v595 = vpop.permute.xlu0 %594
        %598 = vset.pattern.permute.xlu0 0
        %599 = vperm.xlu0 %598, %v559
        %v600 = vpop.permute.xlu0 %599
        %v602 = vsub.f32 %v278, %v565
        %v603 = vsub.f32 %v279, %v565
        %v604 = vsub.f32 %v280, %v570
        %v605 = vsub.f32 %v281, %v570
        %v606 = vsub.f32 %v282, %v575
        %v607 = vsub.f32 %v283, %v575
        %v608 = vsub.f32 %v284, %v580
        %v609 = vsub.f32 %v285, %v580
        %v610 = vsub.f32 %v286, %v585
        %v611 = vsub.f32 %v287, %v585
        %v612 = vsub.f32 %v288, %v590
        %v613 = vsub.f32 %v289, %v590
        %v614 = vsub.f32 %v290, %v595
        %v615 = vsub.f32 %v291, %v595
        %v616 = vsub.f32 %v292, %v600
        %v617 = vsub.f32 %v293, %v600
        %v618 = vmul.f32 %v602, %v602
        %v619 = vmul.f32 %v603, %v603
        %v620 = vmul.f32 %v604, %v604
        %v621 = vmul.f32 %v605, %v605
        %v622 = vmul.f32 %v606, %v606
        %v623 = vmul.f32 %v607, %v607
        %v624 = vmul.f32 %v608, %v608
        %v625 = vmul.f32 %v609, %v609
        %v626 = vmul.f32 %v610, %v610
        %v627 = vmul.f32 %v611, %v611
        %v628 = vmul.f32 %v612, %v612
        %v629 = vmul.f32 %v613, %v613
        %v630 = vmul.f32 %v614, %v614
        %v631 = vmul.f32 %v615, %v615
        %v632 = vmul.f32 %v616, %v616
        %v633 = vmul.f32 %v617, %v617
        %v634 = vadd.f32 %v618, %v619
        %635 = vadd.xlane.f32.xlu0 %v634
        %v636 = vpop.xlane.xlu0 %635
        %v637 = vadd.f32 %v620, %v621
        %638 = vadd.xlane.f32.xlu0 %v637
        %v639 = vpop.xlane.xlu0 %638
        %v640 = vadd.f32 %v622, %v623
        %641 = vadd.xlane.f32.xlu0 %v640
        %v642 = vpop.xlane.xlu0 %641
        %v643 = vadd.f32 %v624, %v625
        %644 = vadd.xlane.f32.xlu0 %v643
        %v645 = vpop.xlane.xlu0 %644
        %v646 = vadd.f32 %v626, %v627
        %647 = vadd.xlane.f32.xlu0 %v646
        %v648 = vpop.xlane.xlu0 %647
        %v649 = vadd.f32 %v628, %v629
        %650 = vadd.xlane.f32.xlu0 %v649
        %v651 = vpop.xlane.xlu0 %650
        %v652 = vadd.f32 %v630, %v631
        %653 = vadd.xlane.f32.xlu0 %v652
        %v654 = vpop.xlane.xlu0 %653
        %v655 = vadd.f32 %v632, %v633
        %656 = vadd.xlane.f32.xlu0 %v655
        %v657 = vpop.xlane.xlu0 %656
        %658 = vmatprep.subr.mxu0 0.0
        %659 = vmatpush1.msra.mxu0 %v636
        %660 = vmatprep.subr.mxu0 0.0
        %661 = vmatpush1.msra.mxu0 %v639
        %662 = vmatprep.subr.mxu0 0.0
        %663 = vmatpush1.msra.mxu0 %v642
        %664 = vmatprep.subr.mxu0 0.0
        %665 = vmatpush1.msra.mxu0 %v645
        %666 = vmatprep.subr.mxu0 0.0
        %667 = vmatpush1.msra.mxu0 %v648
        %668 = vmatprep.subr.mxu0 0.0
        %669 = vmatpush1.msra.mxu0 %v651
        %670 = vmatprep.subr.mxu0 0.0
        %671 = vmatpush1.msra.mxu0 %v654
        %672 = vmatprep.subr.mxu0 0.0
        %673 = vmatpush1.msra.mxu0 %v657
        %674 = vmatprep.subr.mxu0 0.0
        %675 = vmatpush1.msra.mxu0 0.0
        %676 = vmatprep.subr.mxu0 0.0
        %677 = vmatpush1.msra.mxu0 0.0
        %678 = vmatprep.subr.mxu0 0.0
        %679 = vmatpush1.msra.mxu0 0.0
        %680 = vmatprep.subr.mxu0 0.0
        %681 = vmatpush1.msra.mxu0 0.0
        %682 = vmatprep.subr.mxu0 0.0
        %683 = vmatpush1.msra.mxu0 0.0
        %684 = vmatprep.subr.mxu0 0.0
        %685 = vmatpush1.msra.mxu0 0.0
        %686 = vmatprep.subr.mxu0 0.0
        %687 = vmatpush1.msra.mxu0 0.0
        %688 = vmatprep.subr.mxu0 0.0
        %689 = vmatpush1.msra.mxu0 0.0
        %690 = vmatprep.subr.mxu0 0.0
        %691 = vmatpush1.msra.mxu0 0.0
        %692 = vmatprep.subr.mxu0 0.0
        %693 = vmatpush1.msra.mxu0 0.0
        %694 = vmatprep.subr.mxu0 0.0
        %695 = vmatpush1.msra.mxu0 0.0
        %696 = vmatprep.subr.mxu0 0.0
        %697 = vmatpush1.msra.mxu0 0.0
        %698 = vmatprep.subr.mxu0 0.0
        %699 = vmatpush1.msra.mxu0 0.0
        %700 = vmatprep.subr.mxu0 0.0
        %701 = vmatpush1.msra.mxu0 0.0
        %702 = vmatprep.subr.mxu0 0.0
        %703 = vmatpush1.msra.mxu0 0.0
        %704 = vmatprep.subr.mxu0 0.0
        %705 = vmatpush1.msra.mxu0 0.0
        %706 = vmatprep.subr.mxu0 0.0
        %707 = vmatpush1.msra.mxu0 0.0
        %708 = vmatprep.subr.mxu0 0.0
        %709 = vmatpush1.msra.mxu0 0.0
        %710 = vmatprep.subr.mxu0 0.0
        %711 = vmatpush1.msra.mxu0 0.0
        %712 = vmatprep.subr.mxu0 0.0
        %713 = vmatpush1.msra.mxu0 0.0
        %714 = vmatprep.subr.mxu0 0.0
        %715 = vmatpush1.msra.mxu0 0.0
        %716 = vmatprep.subr.mxu0 0.0
        %717 = vmatpush1.msra.mxu0 0.0
        %718 = vmatprep.subr.mxu0 0.0
        %719 = vmatpush1.msra.mxu0 0.0
        %720 = vmatprep.subr.mxu0 0.0
        %721 = vmatpush1.msra.mxu0 0.0
        %722 = vmatprep.mubr.f32.mxu0 0.0
        %723 = vmatmul.mubr.f32.gmra.mrb[0].mxu0 %v324
        %v724 = vpop.f32.mrb[0].mxu0
        %v725 = vadd.f32 0.0, %v724
        %v726 = vpop.f32.mrb[0].mxu0
        %727 = vmatprep.mubr.f32.mxu0 0.0
        %728 = vmatmul.mubr.f32.gmra.mrb[0].mxu0 %v327
        %v729 = vpop.f32.mrb[0].mxu0
        %v730 = vadd.f32 0.0, %v729
        %v731 = vpop.f32.mrb[0].mxu0
        %732 = vmatprep.mubr.f32.mxu0 0.0
        %733 = vmatmul.mubr.f32.gmra.mrb[0].mxu0 %v330
        %v734 = vpop.f32.mrb[0].mxu0
        %v735 = vadd.f32 0.0, %v734
        %v736 = vpop.f32.mrb[0].mxu0
        %737 = vmatprep.mubr.f32.mxu0 0.0
        %738 = vmatmul.mubr.f32.gmra.mrb[0].mxu0 %v333
        %v739 = vpop.f32.mrb[0].mxu0
        %v740 = vadd.f32 0.0, %v739
        %v741 = vpop.f32.mrb[0].mxu0
        %742 = vdwg.mxu0
        %v743 = vmul.f32 %v725, 0.001953125
        %v744 = vmul.f32 %v730, 0.001953125
        %v745 = vmul.f32 %v735, 0.001953125
        %v746 = vmul.f32 %v740, 0.001953125
        %747 = vmatprep.subr.mxu0 0.0
        %748 = vmatpush1.msra.mxu0 %v743
        %749 = vmatprep.subr.mxu0 0.0
        %750 = vmatpush1.msra.mxu0 %v744
        %751 = vmatprep.subr.mxu0 0.0
        %752 = vmatpush1.msra.mxu0 %v745
        %753 = vmatprep.subr.mxu0 0.0
        %754 = vmatpush1.msra.mxu0 %v746
        %755 = vmatprep.subr.mxu0 0.0
        %756 = vmatpush1.msra.mxu0 0.0
        %757 = vmatprep.subr.mxu0 0.0
        %758 = vmatpush1.msra.mxu0 0.0
        %759 = vmatprep.subr.mxu0 0.0
        %760 = vmatpush1.msra.mxu0 0.0
        %761 = vmatprep.subr.mxu0 0.0
        %762 = vmatpush1.msra.mxu0 0.0
        %763 = vmatprep.subr.mxu0 0.0
        %764 = vmatpush1.msra.mxu0 0.0
        %765 = vmatprep.subr.mxu0 0.0
        %766 = vmatpush1.msra.mxu0 0.0
        %767 = vmatprep.subr.mxu0 0.0
        %768 = vmatpush1.msra.mxu0 0.0
        %769 = vmatprep.subr.mxu0 0.0
        %770 = vmatpush1.msra.mxu0 0.0
        %771 = vmatprep.subr.mxu0 0.0
        %772 = vmatpush1.msra.mxu0 0.0
        %773 = vmatprep.subr.mxu0 0.0
        %774 = vmatpush1.msra.mxu0 0.0
        %775 = vmatprep.subr.mxu0 0.0
        %776 = vmatpush1.msra.mxu0 0.0
        %777 = vmatprep.subr.mxu0 0.0
        %778 = vmatpush1.msra.mxu0 0.0
        %779 = vmatprep.subr.mxu0 0.0
        %780 = vmatpush1.msra.mxu0 0.0
        %781 = vmatprep.subr.mxu0 0.0
        %782 = vmatpush1.msra.mxu0 0.0
        %783 = vmatprep.subr.mxu0 0.0
        %784 = vmatpush1.msra.mxu0 0.0
        %785 = vmatprep.subr.mxu0 0.0
        %786 = vmatpush1.msra.mxu0 0.0
        %787 = vmatprep.subr.mxu0 0.0
        %788 = vmatpush1.msra.mxu0 0.0
        %789 = vmatprep.subr.mxu0 0.0
        %790 = vmatpush1.msra.mxu0 0.0
        %791 = vmatprep.subr.mxu0 0.0
        %792 = vmatpush1.msra.mxu0 0.0
        %793 = vmatprep.subr.mxu0 0.0
        %794 = vmatpush1.msra.mxu0 0.0
        %795 = vmatprep.subr.mxu0 0.0
        %796 = vmatpush1.msra.mxu0 0.0
        %797 = vmatprep.subr.mxu0 0.0
        %798 = vmatpush1.msra.mxu0 0.0
        %799 = vmatprep.subr.mxu0 0.0
        %800 = vmatpush1.msra.mxu0 0.0
        %801 = vmatprep.subr.mxu0 0.0
        %802 = vmatpush1.msra.mxu0 0.0
        %803 = vmatprep.subr.mxu0 0.0
        %804 = vmatpush1.msra.mxu0 0.0
        %805 = vmatprep.subr.mxu0 0.0
        %806 = vmatpush1.msra.mxu0 0.0
        %807 = vmatprep.subr.mxu0 0.0
        %808 = vmatpush1.msra.mxu0 0.0
        %809 = vmatprep.subr.mxu0 0.0
        %810 = vmatpush1.msra.mxu0 0.0
        %811 = vmatprep.mubr.f32.mxu0 0.0
        %812 = vmatmul.mubr.f32.gmra.mrb[0].mxu0 %v434
        %v813 = vpop.f32.mrb[0].mxu0
        %v814 = vadd.f32 1e-05, %v813
        %v815 = vpop.f32.mrb[0].mxu0
        %816 = vmatprep.mubr.f32.mxu0 0.0
        %817 = vmatmul.mubr.f32.gmra.mrb[0].mxu0 %v437
        %v818 = vpop.f32.mrb[0].mxu0
        %v819 = vadd.f32 1e-05, %v818
        %v820 = vpop.f32.mrb[0].mxu0
        %821 = vmatprep.mubr.f32.mxu0 0.0
        %822 = vmatmul.mubr.f32.gmra.mrb[0].mxu0 %v440
        %v823 = vpop.f32.mrb[0].mxu0
        %v824 = vadd.f32 1e-05, %v823
        %v825 = vpop.f32.mrb[0].mxu0
        %826 = vmatprep.mubr.f32.mxu0 0.0
        %827 = vmatmul.mubr.f32.gmra.mrb[0].mxu0 %v443
        %v828 = vpop.f32.mrb[0].mxu0
        %v829 = vadd.f32 1e-05, %v828
        %v830 = vpop.f32.mrb[0].mxu0
        %831 = vmatprep.mubr.f32.mxu0 0.0
        %832 = vmatmul.mubr.f32.gmra.mrb[0].mxu0 %v446
        %v833 = vpop.f32.mrb[0].mxu0
        %v834 = vadd.f32 1e-05, %v833
        %v835 = vpop.f32.mrb[0].mxu0
        %836 = vmatprep.mubr.f32.mxu0 0.0
        %837 = vmatmul.mubr.f32.gmra.mrb[0].mxu0 %v449
        %v838 = vpop.f32.mrb[0].mxu0
        %v839 = vadd.f32 1e-05, %v838
        %v840 = vpop.f32.mrb[0].mxu0
        %841 = vmatprep.mubr.f32.mxu0 0.0
        %842 = vmatmul.mubr.f32.gmra.mrb[0].mxu0 %v452
        %v843 = vpop.f32.mrb[0].mxu0
        %v844 = vadd.f32 1e-05, %v843
        %v845 = vpop.f32.mrb[0].mxu0
        %846 = vmatprep.mubr.f32.mxu0 0.0
        %847 = vmatmul.mubr.f32.gmra.mrb[0].mxu0 %v455
        %v848 = vpop.f32.mrb[0].mxu0
        %v849 = vadd.f32 1e-05, %v848
        %v850 = vpop.f32.mrb[0].mxu0
        %851 = vdwg.mxu0
        %v852 = vrsqrt.pop %v814
        %v853 = vrsqrt.pop %v819
        %v854 = vrsqrt.pop %v824
        %v855 = vrsqrt.pop %v829
        %v856 = vrsqrt.pop %v834
        %v857 = vrsqrt.pop %v839
        %v858 = vrsqrt.pop %v844
        %v859 = vrsqrt.pop %v849
        %861 = vset.pattern.permute.xlu0 0
        %862 = vperm.xlu0 %861, %v852
        %v863 = vpop.permute.xlu0 %862
        %866 = vset.pattern.permute.xlu0 0
        %867 = vperm.xlu0 %866, %v853
        %v868 = vpop.permute.xlu0 %867
        %871 = vset.pattern.permute.xlu0 0
        %872 = vperm.xlu0 %871, %v854
        %v873 = vpop.permute.xlu0 %872
        %876 = vset.pattern.permute.xlu0 0
        %877 = vperm.xlu0 %876, %v855
        %v878 = vpop.permute.xlu0 %877
        %881 = vset.pattern.permute.xlu0 0
        %882 = vperm.xlu0 %881, %v856
        %v883 = vpop.permute.xlu0 %882
        %886 = vset.pattern.permute.xlu0 0
        %887 = vperm.xlu0 %886, %v857
        %v888 = vpop.permute.xlu0 %887
        %891 = vset.pattern.permute.xlu0 0
        %892 = vperm.xlu0 %891, %v858
        %v893 = vpop.permute.xlu0 %892
        %896 = vset.pattern.permute.xlu0 0
        %897 = vperm.xlu0 %896, %v859
        %v898 = vpop.permute.xlu0 %897
        %v900 = vmul.f32 %v602, %v863
        %v901 = vmul.f32 %v603, %v863
        %v902 = vmul.f32 %v604, %v868
        %v903 = vmul.f32 %v605, %v868
        %v904 = vmul.f32 %v606, %v873
        %v905 = vmul.f32 %v607, %v873
        %v906 = vmul.f32 %v608, %v878
        %v907 = vmul.f32 %v609, %v878
        %v908 = vmul.f32 %v610, %v883
        %v909 = vmul.f32 %v611, %v883
        %v910 = vmul.f32 %v612, %v888
        %v911 = vmul.f32 %v613, %v888
        %v912 = vmul.f32 %v614, %v893
        %v913 = vmul.f32 %v615, %v893
        %v914 = vmul.f32 %v616, %v898
        %v915 = vmul.f32 %v617, %v898
        %v916 = vld [vmem:[%s3] sm:$0xff]
        %v917 = vld [vmem:[%s3 + $0x8] sm:$0xff]
        %v918 = vld [vmem:[%s3 + $0x10] sm:$0xff]
        %v919 = vld [vmem:[%s3 + $0x18] sm:$0xff]
        %v920 = vld [vmem:[%s3 + $0x20] sm:$0xff]
        %v921 = vld [vmem:[%s3 + $0x28] sm:$0xff]
        %v922 = vld [vmem:[%s3 + $0x30] sm:$0xff]
        %v923 = vld [vmem:[%s3 + $0x38] sm:$0xff]
        %925 = vset.pattern.permute.xlu0 0
        %926 = vperm.xlu0 %925, %v916
        %v927 = vpop.permute.xlu0 %926
        %930 = vset.pattern.permute.xlu0 0
        %931 = vperm.xlu0 %930, %v917
        %v932 = vpop.permute.xlu0 %931
        %935 = vset.pattern.permute.xlu0 0
        %936 = vperm.xlu0 %935, %v918
        %v937 = vpop.permute.xlu0 %936
        %940 = vset.pattern.permute.xlu0 0
        %941 = vperm.xlu0 %940, %v919
        %v942 = vpop.permute.xlu0 %941
        %945 = vset.pattern.permute.xlu0 0
        %946 = vperm.xlu0 %945, %v920
        %v947 = vpop.permute.xlu0 %946
        %950 = vset.pattern.permute.xlu0 0
        %951 = vperm.xlu0 %950, %v921
        %v952 = vpop.permute.xlu0 %951
        %955 = vset.pattern.permute.xlu0 0
        %956 = vperm.xlu0 %955, %v922
        %v957 = vpop.permute.xlu0 %956
        %960 = vset.pattern.permute.xlu0 0
        %961 = vperm.xlu0 %960, %v923
        %v962 = vpop.permute.xlu0 %961
        %v964 = vmul.f32 %v900, %v927
        %v965 = vmul.f32 %v901, %v927
        %v966 = vmul.f32 %v902, %v932
        %v967 = vmul.f32 %v903, %v932
        %v968 = vmul.f32 %v904, %v937
        %v969 = vmul.f32 %v905, %v937
        %v970 = vmul.f32 %v906, %v942
        %v971 = vmul.f32 %v907, %v942
        %v972 = vmul.f32 %v908, %v947
        %v973 = vmul.f32 %v909, %v947
        %v974 = vmul.f32 %v910, %v952
        %v975 = vmul.f32 %v911, %v952
        %v976 = vmul.f32 %v912, %v957
        %v977 = vmul.f32 %v913, %v957
        %v978 = vmul.f32 %v914, %v962
        %v979 = vmul.f32 %v915, %v962
        %v980 = vld [vmem:[%s4] sm:$0xff]
        %v981 = vld [vmem:[%s4 + $0x8] sm:$0xff]
        %v982 = vld [vmem:[%s4 + $0x10] sm:$0xff]
        %v983 = vld [vmem:[%s4 + $0x18] sm:$0xff]
        %v984 = vld [vmem:[%s4 + $0x20] sm:$0xff]
        %v985 = vld [vmem:[%s4 + $0x28] sm:$0xff]
        %v986 = vld [vmem:[%s4 + $0x30] sm:$0xff]
        %v987 = vld [vmem:[%s4 + $0x38] sm:$0xff]
        %989 = vset.pattern.permute.xlu0 0
        %990 = vperm.xlu0 %989, %v980
        %v991 = vpop.permute.xlu0 %990
        %994 = vset.pattern.permute.xlu0 0
        %995 = vperm.xlu0 %994, %v981
        %v996 = vpop.permute.xlu0 %995
        %999 = vset.pattern.permute.xlu0 0
        %1000 = vperm.xlu0 %999, %v982
        %v1001 = vpop.permute.xlu0 %1000
        %1004 = vset.pattern.permute.xlu0 0
        %1005 = vperm.xlu0 %1004, %v983
        %v1006 = vpop.permute.xlu0 %1005
        %1009 = vset.pattern.permute.xlu0 0
        %1010 = vperm.xlu0 %1009, %v984
        %v1011 = vpop.permute.xlu0 %1010
        %1014 = vset.pattern.permute.xlu0 0
        %1015 = vperm.xlu0 %1014, %v985
        %v1016 = vpop.permute.xlu0 %1015
        %1019 = vset.pattern.permute.xlu0 0
        %1020 = vperm.xlu0 %1019, %v986
        %v1021 = vpop.permute.xlu0 %1020
        %1024 = vset.pattern.permute.xlu0 0
        %1025 = vperm.xlu0 %1024, %v987
        %v1026 = vpop.permute.xlu0 %1025
        %v1028 = vadd.f32 %v964, %v991
        %v1029 = vadd.f32 %v965, %v991
        %v1030 = vadd.f32 %v966, %v996
        %v1031 = vadd.f32 %v967, %v996
        %v1032 = vadd.f32 %v968, %v1001
        %v1033 = vadd.f32 %v969, %v1001
        %v1034 = vadd.f32 %v970, %v1006
        %v1035 = vadd.f32 %v971, %v1006
        %v1036 = vadd.f32 %v972, %v1011
        %v1037 = vadd.f32 %v973, %v1011
        %v1038 = vadd.f32 %v974, %v1016
        %v1039 = vadd.f32 %v975, %v1016
        %v1040 = vadd.f32 %v976, %v1021
        %v1041 = vadd.f32 %v977, %v1021
        %v1042 = vadd.f32 %v978, %v1026
        %v1043 = vadd.f32 %v979, %v1026
        %v1044 = vld [vmem:[%s5] sm:$0xf]
        %v1045 = vld [vmem:[%s5 + $0x4] sm:$0xf]
        %v1046 = vld [vmem:[%s5 + $0x8] sm:$0xf]
        %v1047 = vld [vmem:[%s5 + $0xc] sm:$0xf]
        %v1048 = vld [vmem:[%s5 + $0x10] sm:$0xf]
        %v1049 = vld [vmem:[%s5 + $0x14] sm:$0xf]
        %v1050 = vld [vmem:[%s5 + $0x18] sm:$0xf]
        %v1051 = vld [vmem:[%s5 + $0x1c] sm:$0xf]
        %v1052 = vld [vmem:[%s5 + $0x20] sm:$0xf]
        %v1053 = vld [vmem:[%s5 + $0x24] sm:$0xf]
        %v1054 = vld [vmem:[%s5 + $0x28] sm:$0xf]
        %v1055 = vld [vmem:[%s5 + $0x2c] sm:$0xf]
        %v1056 = vld [vmem:[%s5 + $0x30] sm:$0xf]
        %v1057 = vld [vmem:[%s5 + $0x34] sm:$0xf]
        %v1058 = vld [vmem:[%s5 + $0x38] sm:$0xf]
        %v1059 = vld [vmem:[%s5 + $0x3c] sm:$0xf]
        %v1060 = vld [vmem:[%s5 + $0x40] sm:$0xf]
        %v1061 = vld [vmem:[%s5 + $0x44] sm:$0xf]
        %v1062 = vld [vmem:[%s5 + $0x48] sm:$0xf]
        %v1063 = vld [vmem:[%s5 + $0x4c] sm:$0xf]
        %v1064 = vld [vmem:[%s5 + $0x50] sm:$0xf]
        %v1065 = vld [vmem:[%s5 + $0x54] sm:$0xf]
        %v1066 = vld [vmem:[%s5 + $0x58] sm:$0xf]
        %v1067 = vld [vmem:[%s5 + $0x5c] sm:$0xf]
        %v1068 = vpack.c.bf16 %v1030, %v1028
        %v1069 = vpack.c.bf16 %v1031, %v1029
        %v1070 = vpack.c.bf16 %v1034, %v1032
        %v1071 = vpack.c.bf16 %v1035, %v1033
        %v1072 = vpack.c.bf16 %v1038, %v1036
        %v1073 = vpack.c.bf16 %v1039, %v1037
        %v1074 = vpack.c.bf16 %v1042, %v1040
        %v1075 = vpack.c.bf16 %v1043, %v1041
        %v1076 = vld [vmem:[%s6] sm:$0xff]
        %v1077 = vld [vmem:[%s6 + $0x8] sm:$0xff]
        %v1078 = vld [vmem:[%s6 + $0x10] sm:$0xff]
        %v1079 = vld [vmem:[%s6 + $0x18] sm:$0xff]
        %v1080 = vld [vmem:[%s6 + $0x20] sm:$0xff]
        %v1081 = vld [vmem:[%s6 + $0x28] sm:$0xff]
        %v1082 = vld [vmem:[%s6 + $0x30] sm:$0xff]
        %v1083 = vld [vmem:[%s6 + $0x38] sm:$0xff]
        %v1084 = vld [vmem:[%s6 + $0x40] sm:$0xff]
        %v1085 = vld [vmem:[%s6 + $0x48] sm:$0xff]
        %v1086 = vld [vmem:[%s6 + $0x50] sm:$0xff]
        %v1087 = vld [vmem:[%s6 + $0x58] sm:$0xff]
        %v1088 = vld [vmem:[%s6 + $0x60] sm:$0xff]
        %v1089 = vld [vmem:[%s6 + $0x68] sm:$0xff]
        %v1090 = vld [vmem:[%s6 + $0x70] sm:$0xff]
        %v1091 = vld [vmem:[%s6 + $0x78] sm:$0xff]
        %v1092 = vld [vmem:[%s6 + $0x80] sm:$0xff]
        %v1093 = vld [vmem:[%s6 + $0x88] sm:$0xff]
        %v1094 = vld [vmem:[%s6 + $0x90] sm:$0xff]
        %v1095 = vld [vmem:[%s6 + $0x98] sm:$0xff]
        %v1096 = vld [vmem:[%s6 + $0xa0] sm:$0xff]
        %v1097 = vld [vmem:[%s6 + $0xa8] sm:$0xff]
        %v1098 = vld [vmem:[%s6 + $0xb0] sm:$0xff]
        %v1099 = vld [vmem:[%s6 + $0xb8] sm:$0xff]
        %1101 = vset.pattern.permute.xlu0 0
        %1102 = vperm.xlu0 %1101, %v1076
        %v1103 = vpop.permute.xlu0 %1102
        %1106 = vset.pattern.permute.xlu0 0
        %1107 = vperm.xlu0 %1106, %v1077
        %v1108 = vpop.permute.xlu0 %1107
        %1111 = vset.pattern.permute.xlu0 0
        %1112 = vperm.xlu0 %1111, %v1078
        %v1113 = vpop.permute.xlu0 %1112
        %1116 = vset.pattern.permute.xlu0 0
        %1117 = vperm.xlu0 %1116, %v1079
        %v1118 = vpop.permute.xlu0 %1117
        %1121 = vset.pattern.permute.xlu0 0
        %1122 = vperm.xlu0 %1121, %v1080
        %v1123 = vpop.permute.xlu0 %1122
        %1126 = vset.pattern.permute.xlu0 0
        %1127 = vperm.xlu0 %1126, %v1081
        %v1128 = vpop.permute.xlu0 %1127
        %1131 = vset.pattern.permute.xlu0 0
        %1132 = vperm.xlu0 %1131, %v1082
        %v1133 = vpop.permute.xlu0 %1132
        %1136 = vset.pattern.permute.xlu0 0
        %1137 = vperm.xlu0 %1136, %v1083
        %v1138 = vpop.permute.xlu0 %1137
        %1141 = vset.pattern.permute.xlu0 0
        %1142 = vperm.xlu0 %1141, %v1084
        %v1143 = vpop.permute.xlu0 %1142
        %1146 = vset.pattern.permute.xlu0 0
        %1147 = vperm.xlu0 %1146, %v1085
        %v1148 = vpop.permute.xlu0 %1147
        %1151 = vset.pattern.permute.xlu0 0
        %1152 = vperm.xlu0 %1151, %v1086
        %v1153 = vpop.permute.xlu0 %1152
        %1156 = vset.pattern.permute.xlu0 0
        %1157 = vperm.xlu0 %1156, %v1087
        %v1158 = vpop.permute.xlu0 %1157
        %1161 = vset.pattern.permute.xlu0 0
        %1162 = vperm.xlu0 %1161, %v1088
        %v1163 = vpop.permute.xlu0 %1162
        %1166 = vset.pattern.permute.xlu0 0
        %1167 = vperm.xlu0 %1166, %v1089
        %v1168 = vpop.permute.xlu0 %1167
        %1171 = vset.pattern.permute.xlu0 0
        %1172 = vperm.xlu0 %1171, %v1090
        %v1173 = vpop.permute.xlu0 %1172
        %1176 = vset.pattern.permute.xlu0 0
        %1177 = vperm.xlu0 %1176, %v1091
        %v1178 = vpop.permute.xlu0 %1177
        %1181 = vset.pattern.permute.xlu0 0
        %1182 = vperm.xlu0 %1181, %v1092
        %v1183 = vpop.permute.xlu0 %1182
        %1186 = vset.pattern.permute.xlu0 0
        %1187 = vperm.xlu0 %1186, %v1093
        %v1188 = vpop.permute.xlu0 %1187
        %1191 = vset.pattern.permute.xlu0 0
        %1192 = vperm.xlu0 %1191, %v1094
        %v1193 = vpop.permute.xlu0 %1192
        %1196 = vset.pattern.permute.xlu0 0
        %1197 = vperm.xlu0 %1196, %v1095
        %v1198 = vpop.permute.xlu0 %1197
        %1201 = vset.pattern.permute.xlu0 0
        %1202 = vperm.xlu0 %1201, %v1096
        %v1203 = vpop.permute.xlu0 %1202
        %1206 = vset.pattern.permute.xlu0 0
        %1207 = vperm.xlu0 %1206, %v1097
        %v1208 = vpop.permute.xlu0 %1207
        %1211 = vset.pattern.permute.xlu0 0
        %1212 = vperm.xlu0 %1211, %v1098
        %v1213 = vpop.permute.xlu0 %1212
        %1216 = vset.pattern.permute.xlu0 0
        %1217 = vperm.xlu0 %1216, %v1099
        %v1218 = vpop.permute.xlu0 %1217
        %v1244 = vunpack.c.l.b16 %v1044
        %v1245 = vunpack.c.l.b16 %v1045
        %v1246 = vunpack.c.l.b16 %v1046
        %v1247 = vunpack.c.l.b16 %v1047
        %v1248 = vunpack.c.l.b16 %v1048
        %v1249 = vunpack.c.l.b16 %v1049
        %v1250 = vunpack.c.l.b16 %v1050
        %v1251 = vunpack.c.l.b16 %v1051
        %v1252 = vunpack.c.l.b16 %v1052
        %v1253 = vunpack.c.l.b16 %v1053
        %v1254 = vunpack.c.l.b16 %v1054
        %v1255 = vunpack.c.l.b16 %v1055
        %v1256 = vunpack.c.l.b16 %v1056
        %v1257 = vunpack.c.l.b16 %v1057
        %v1258 = vunpack.c.l.b16 %v1058
        %v1259 = vunpack.c.l.b16 %v1059
        %v1260 = vunpack.c.l.b16 %v1060
        %v1261 = vunpack.c.l.b16 %v1061
        %v1262 = vunpack.c.l.b16 %v1062
        %v1263 = vunpack.c.l.b16 %v1063
        %v1264 = vunpack.c.l.b16 %v1064
        %v1265 = vunpack.c.l.b16 %v1065
        %v1266 = vunpack.c.l.b16 %v1066
        %v1267 = vunpack.c.l.b16 %v1067
        %v1268 = vpack.c.b16 %v1245, %v1244
        %v1269 = vpack.c.b16 %v1247, %v1246
        %v1270 = vpack.c.b16 %v1249, %v1248
        %v1271 = vpack.c.b16 %v1251, %v1250
        %v1272 = vpack.c.b16 %v1253, %v1252
        %v1273 = vpack.c.b16 %v1255, %v1254
        %v1274 = vpack.c.b16 %v1257, %v1256
        %v1275 = vpack.c.b16 %v1259, %v1258
        %v1276 = vpack.c.b16 %v1261, %v1260
        %v1277 = vpack.c.b16 %v1263, %v1262
        %v1278 = vpack.c.b16 %v1265, %v1264
        %v1279 = vpack.c.b16 %v1267, %v1266
        %v1281 = vsel %vm322, %v1268, 0
        %v1284 = vsel %vm322, %v1269, 0
        %v1287 = vsel %vm322, %v1270, 0
        %v1290 = vsel %vm322, %v1271, 0
        %v1293 = vsel %vm322, %v1272, 0
        %v1296 = vsel %vm322, %v1273, 0
        %v1299 = vsel %vm322, %v1274, 0
        %v1302 = vsel %vm322, %v1275, 0
        %v1305 = vsel %vm322, %v1276, 0
        %v1308 = vsel %vm322, %v1277, 0
        %v1311 = vsel %vm322, %v1278, 0
        %v1314 = vsel %vm322, %v1279, 0
        %1316 = vmatprep.subr.bf16.mxu0 %v1069
        %1317 = vmatpush1.bf16.msra.mxu0 %v1068
        %1318 = vmatprep.subr.bf16.mxu0 %v1071
        %1319 = vmatpush1.bf16.msra.mxu0 %v1070
        %1320 = vmatprep.subr.bf16.mxu0 %v1073
        %1321 = vmatpush1.bf16.msra.mxu0 %v1072
        %1322 = vmatprep.subr.bf16.mxu0 %v1075
        %1323 = vmatpush1.bf16.msra.mxu0 %v1074
        %1324 = vmatprep.subr.bf16.mxu0 0
        %1325 = vmatpush1.bf16.msra.mxu0 0
        %1326 = vmatprep.subr.bf16.mxu0 0
        %1327 = vmatpush1.bf16.msra.mxu0 0
        %1328 = vmatprep.subr.bf16.mxu0 0
        %1329 = vmatpush1.bf16.msra.mxu0 0
        %1330 = vmatprep.subr.bf16.mxu0 0
        %1331 = vmatpush1.bf16.msra.mxu0 0
        %1332 = vmatprep.subr.bf16.mxu0 0
        %1333 = vmatpush1.bf16.msra.mxu0 0
        %1334 = vmatprep.subr.bf16.mxu0 0
        %1335 = vmatpush1.bf16.msra.mxu0 0
        %1336 = vmatprep.subr.bf16.mxu0 0
        %1337 = vmatpush1.bf16.msra.mxu0 0
        %1338 = vmatprep.subr.bf16.mxu0 0
        %1339 = vmatpush1.bf16.msra.mxu0 0
        %1340 = vmatprep.subr.bf16.mxu0 0
        %1341 = vmatpush1.bf16.msra.mxu0 0
        %1342 = vmatprep.subr.bf16.mxu0 0
        %1343 = vmatpush1.bf16.msra.mxu0 0
        %1344 = vmatprep.subr.bf16.mxu0 0
        %1345 = vmatpush1.bf16.msra.mxu0 0
        %1346 = vmatprep.subr.bf16.mxu0 0
        %1347 = vmatpush1.bf16.msra.mxu0 0
        %1348 = vmatprep.mubr.bf16.mxu0 0
        %1349 = vmatmul.mubr.bf16.gmra.mrb[0].mxu0 %v1281
        %v1350 = vpop.f32.mrb[0].mxu0
        %v1351 = vadd.f32 %v1103, %v1350
        %v1352 = vpop.f32.mrb[0].mxu0
        %v1353 = vadd.f32 %v1103, %v1352
        %v1354 = vpop.f32.mrb[0].mxu0
        %v1355 = vadd.f32 %v1108, %v1354
        %v1356 = vpop.f32.mrb[0].mxu0
        %v1357 = vadd.f32 %v1108, %v1356
        %1358 = vmatprep.mubr.bf16.mxu0 0
        %1359 = vmatmul.mubr.bf16.gmra.mrb[0].mxu0 %v1284
        %v1360 = vpop.f32.mrb[0].mxu0
        %v1361 = vadd.f32 %v1113, %v1360
        %v1362 = vpop.f32.mrb[0].mxu0
        %v1363 = vadd.f32 %v1113, %v1362
        %v1364 = vpop.f32.mrb[0].mxu0
        %v1365 = vadd.f32 %v1118, %v1364
        %v1366 = vpop.f32.mrb[0].mxu0
        %v1367 = vadd.f32 %v1118, %v1366
        %1368 = vmatprep.mubr.bf16.mxu0 0
        %1369 = vmatmul.mubr.bf16.gmra.mrb[0].mxu0 %v1287
        %v1370 = vpop.f32.mrb[0].mxu0
        %v1371 = vadd.f32 %v1123, %v1370
        %v1372 = vpop.f32.mrb[0].mxu0
        %v1373 = vadd.f32 %v1123, %v1372
        %v1374 = vpop.f32.mrb[0].mxu0
        %v1375 = vadd.f32 %v1128, %v1374
        %v1376 = vpop.f32.mrb[0].mxu0
        %v1377 = vadd.f32 %v1128, %v1376
        %1378 = vmatprep.mubr.bf16.mxu0 0
        %1379 = vmatmul.mubr.bf16.gmra.mrb[0].mxu0 %v1290
        %v1380 = vpop.f32.mrb[0].mxu0
        %v1381 = vadd.f32 %v1133, %v1380
        %v1382 = vpop.f32.mrb[0].mxu0
        %v1383 = vadd.f32 %v1133, %v1382
        %v1384 = vpop.f32.mrb[0].mxu0
        %v1385 = vadd.f32 %v1138, %v1384
        %v1386 = vpop.f32.mrb[0].mxu0
        %v1387 = vadd.f32 %v1138, %v1386
        %1388 = vmatprep.mubr.bf16.mxu0 0
        %1389 = vmatmul.mubr.bf16.gmra.mrb[0].mxu0 %v1293
        %v1390 = vpop.f32.mrb[0].mxu0
        %v1391 = vadd.f32 %v1143, %v1390
        %v1392 = vpop.f32.mrb[0].mxu0
        %v1393 = vadd.f32 %v1143, %v1392
        %v1394 = vpop.f32.mrb[0].mxu0
        %v1395 = vadd.f32 %v1148, %v1394
        %v1396 = vpop.f32.mrb[0].mxu0
        %v1397 = vadd.f32 %v1148, %v1396
        %1398 = vmatprep.mubr.bf16.mxu0 0
        %1399 = vmatmul.mubr.bf16.gmra.mrb[0].mxu0 %v1296
        %v1400 = vpop.f32.mrb[0].mxu0
        %v1401 = vadd.f32 %v1153, %v1400
        %v1402 = vpop.f32.mrb[0].mxu0
        %v1403 = vadd.f32 %v1153, %v1402
        %v1404 = vpop.f32.mrb[0].mxu0
        %v1405 = vadd.f32 %v1158, %v1404
        %v1406 = vpop.f32.mrb[0].mxu0
        %v1407 = vadd.f32 %v1158, %v1406
        %1408 = vmatprep.mubr.bf16.mxu0 0
        %1409 = vmatmul.mubr.bf16.gmra.mrb[0].mxu0 %v1299
        %v1410 = vpop.f32.mrb[0].mxu0
        %v1411 = vadd.f32 %v1163, %v1410
        %v1412 = vpop.f32.mrb[0].mxu0
        %v1413 = vadd.f32 %v1163, %v1412
        %v1414 = vpop.f32.mrb[0].mxu0
        %v1415 = vadd.f32 %v1168, %v1414
        %v1416 = vpop.f32.mrb[0].mxu0
        %v1417 = vadd.f32 %v1168, %v1416
        %1418 = vmatprep.mubr.bf16.mxu0 0
        %1419 = vmatmul.mubr.bf16.gmra.mrb[0].mxu0 %v1302
        %v1420 = vpop.f32.mrb[0].mxu0
        %v1421 = vadd.f32 %v1173, %v1420
        %v1422 = vpop.f32.mrb[0].mxu0
        %v1423 = vadd.f32 %v1173, %v1422
        %v1424 = vpop.f32.mrb[0].mxu0
        %v1425 = vadd.f32 %v1178, %v1424
        %v1426 = vpop.f32.mrb[0].mxu0
        %v1427 = vadd.f32 %v1178, %v1426
        %1428 = vmatprep.mubr.bf16.mxu0 0
        %1429 = vmatmul.mubr.bf16.gmra.mrb[0].mxu0 %v1305
        %v1430 = vpop.f32.mrb[0].mxu0
        %v1431 = vadd.f32 %v1183, %v1430
        %v1432 = vpop.f32.mrb[0].mxu0
        %v1433 = vadd.f32 %v1183, %v1432
        %v1434 = vpop.f32.mrb[0].mxu0
        %v1435 = vadd.f32 %v1188, %v1434
        %v1436 = vpop.f32.mrb[0].mxu0
        %v1437 = vadd.f32 %v1188, %v1436
        %1438 = vmatprep.mubr.bf16.mxu0 0
        %1439 = vmatmul.mubr.bf16.gmra.mrb[0].mxu0 %v1308
        %v1440 = vpop.f32.mrb[0].mxu0
        %v1441 = vadd.f32 %v1193, %v1440
        %v1442 = vpop.f32.mrb[0].mxu0
        %v1443 = vadd.f32 %v1193, %v1442
        %v1444 = vpop.f32.mrb[0].mxu0
        %v1445 = vadd.f32 %v1198, %v1444
        %v1446 = vpop.f32.mrb[0].mxu0
        %v1447 = vadd.f32 %v1198, %v1446
        %1448 = vmatprep.mubr.bf16.mxu0 0
        %1449 = vmatmul.mubr.bf16.gmra.mrb[0].mxu0 %v1311
        %v1450 = vpop.f32.mrb[0].mxu0
        %v1451 = vadd.f32 %v1203, %v1450
        %v1452 = vpop.f32.mrb[0].mxu0
        %v1453 = vadd.f32 %v1203, %v1452
        %v1454 = vpop.f32.mrb[0].mxu0
        %v1455 = vadd.f32 %v1208, %v1454
        %v1456 = vpop.f32.mrb[0].mxu0
        %v1457 = vadd.f32 %v1208, %v1456
        %1458 = vmatprep.mubr.bf16.mxu0 0
        %1459 = vmatmul.mubr.bf16.gmra.mrb[0].mxu0 %v1314
        %v1460 = vpop.f32.mrb[0].mxu0
        %v1461 = vadd.f32 %v1213, %v1460
        %v1462 = vpop.f32.mrb[0].mxu0
        %v1463 = vadd.f32 %v1213, %v1462
        %v1464 = vpop.f32.mrb[0].mxu0
        %v1465 = vadd.f32 %v1218, %v1464
        %v1466 = vpop.f32.mrb[0].mxu0
        %v1467 = vadd.f32 %v1218, %v1466
        %1468 = vdwg.mxu0
        %1469 = vst [vmem:[%s271] sm:$0xff] %v1351
        %1470 = vst [vmem:[%s271 + $0x8] sm:$0xff] %v1353
        %1471 = vst [vmem:[%s271 + $0x10] sm:$0xff] %v1355
        %1472 = vst [vmem:[%s271 + $0x18] sm:$0xff] %v1357
        %1473 = vst [vmem:[%s271 + $0x20] sm:$0xff] %v1361
        %1474 = vst [vmem:[%s271 + $0x28] sm:$0xff] %v1363
        %1475 = vst [vmem:[%s271 + $0x30] sm:$0xff] %v1365
        %1476 = vst [vmem:[%s271 + $0x38] sm:$0xff] %v1367
        %1477 = vst [vmem:[%s271 + $0x40] sm:$0xff] %v1371
        %1478 = vst [vmem:[%s271 + $0x48] sm:$0xff] %v1373
        %1479 = vst [vmem:[%s271 + $0x50] sm:$0xff] %v1375
        %1480 = vst [vmem:[%s271 + $0x58] sm:$0xff] %v1377
        %1481 = vst [vmem:[%s271 + $0x60] sm:$0xff] %v1381
        %1482 = vst [vmem:[%s271 + $0x68] sm:$0xff] %v1383
        %1483 = vst [vmem:[%s271 + $0x70] sm:$0xff] %v1385
        %1484 = vst [vmem:[%s271 + $0x78] sm:$0xff] %v1387
        %1485 = vst [vmem:[%s271 + $0x80] sm:$0xff] %v1391
        %1486 = vst [vmem:[%s271 + $0x88] sm:$0xff] %v1393
        %1487 = vst [vmem:[%s271 + $0x90] sm:$0xff] %v1395
        %1488 = vst [vmem:[%s271 + $0x98] sm:$0xff] %v1397
        %1489 = vst [vmem:[%s271 + $0xa0] sm:$0xff] %v1401
        %1490 = vst [vmem:[%s271 + $0xa8] sm:$0xff] %v1403
        %1491 = vst [vmem:[%s271 + $0xb0] sm:$0xff] %v1405
        %1492 = vst [vmem:[%s271 + $0xb8] sm:$0xff] %v1407
        %1493 = vst [vmem:[%s271 + $0xc0] sm:$0xff] %v1411
        %1494 = vst [vmem:[%s271 + $0xc8] sm:$0xff] %v1413
        %1495 = vst [vmem:[%s271 + $0xd0] sm:$0xff] %v1415
        %1496 = vst [vmem:[%s271 + $0xd8] sm:$0xff] %v1417
        %1497 = vst [vmem:[%s271 + $0xe0] sm:$0xff] %v1421
        %1498 = vst [vmem:[%s271 + $0xe8] sm:$0xff] %v1423
        %1499 = vst [vmem:[%s271 + $0xf0] sm:$0xff] %v1425
        %1500 = vst [vmem:[%s271 + $0xf8] sm:$0xff] %v1427
        %1501 = vst [vmem:[%s271 + $0x100] sm:$0xff] %v1431
        %1502 = vst [vmem:[%s271 + $0x108] sm:$0xff] %v1433
        %1503 = vst [vmem:[%s271 + $0x110] sm:$0xff] %v1435
        %1504 = vst [vmem:[%s271 + $0x118] sm:$0xff] %v1437
        %1505 = vst [vmem:[%s271 + $0x120] sm:$0xff] %v1441
        %1506 = vst [vmem:[%s271 + $0x128] sm:$0xff] %v1443
        %1507 = vst [vmem:[%s271 + $0x130] sm:$0xff] %v1445
        %1508 = vst [vmem:[%s271 + $0x138] sm:$0xff] %v1447
        %1509 = vst [vmem:[%s271 + $0x140] sm:$0xff] %v1451
        %1510 = vst [vmem:[%s271 + $0x148] sm:$0xff] %v1453
        %1511 = vst [vmem:[%s271 + $0x150] sm:$0xff] %v1455
        %1512 = vst [vmem:[%s271 + $0x158] sm:$0xff] %v1457
        %1513 = vst [vmem:[%s271 + $0x160] sm:$0xff] %v1461
        %1514 = vst [vmem:[%s271 + $0x168] sm:$0xff] %v1463
        %1515 = vst [vmem:[%s271 + $0x170] sm:$0xff] %v1465
        %1516 = vst [vmem:[%s271 + $0x178] sm:$0xff] %v1467
        %s1517 = sand.u32 %s181, 1
        %s1518 = scalar_lea.sflag [#allocation3], %s1517
        %s1519 = sand.u32 %s181, 1
        %s1520 = smul.addr %s1519, 384
        %s1521 = scalar_lea.vmem [#allocation2], %s1520
        // Predicated region
        $region49: #{tpu_custom_call.1} parent=47 // pred_check
          %p1522 = pneg %p191
        $region50: #{tpu_custom_call.1} parent=47 // pred_check_branch
          %1524 = sbr.rel (%p1522) target = $region52
        $region51: #{tpu_custom_call.1} parent=47 // pred_region
          %s1526 = ssub.s32 6144, 6144
          %1527 = vsyncadd %s1518, %s1526
          %s1528 = smul.addr %s21, 48
          %s1529 = smul.addr %s1528, 128
          %s1530 = scalar_lea.hbm %s7, %s1529
          %s1531 = sshll.u32 %s1521, 4
          %s1532 = int_to_ptr.vmem [resolvable:$true] %s1531
          %1537 = dma.vmem_to_hbm [thread:$0]  %s1532, 6144, %s1530, %s1518, 256, 256, 16
        $region52: #{tpu_custom_call.1} parent=47 // pred_fallthru
          _
      $region48: #{tpu_custom_call.1} parent=5 // pred_fallthru
        _
      %p1538 = scmp.le.s32.totalorder 2, %s16
      // Predicated region
      $region53: #{tpu_custom_call.1} parent=5 // pred_check
        %p1539 = pneg %p1538
      $region54: #{tpu_custom_call.1} parent=5 // pred_check_branch
        %1541 = sbr.rel (%p1539) target = $region56
      $region55: #{tpu_custom_call.1} parent=5 // pred_region
        %s1542 = ssub.s32 %s16, 2
        // Predicated region
        $region57: #{tpu_custom_call.1} parent=55 // pred_check
          %p1543 = pneg %p197
        $region58: #{tpu_custom_call.1} parent=55 // pred_check_branch
          %1545 = sbr.rel (%p1543) target = $region60
        $region59: #{tpu_custom_call.1} parent=55 // pred_region
          %s1546 = sand.u32 %s182, 1
          %s1547 = scalar_lea.sflag [#allocation3], %s1546
          %s1548 = sand.u32 %s182, 1
          %s1549 = smul.addr %s1548, 384
          %s1550 = scalar_lea.vmem [#allocation2], %s1549
          %1551 = dma.done %s1547, 6144
        $region60: #{tpu_custom_call.1} parent=55 // pred_fallthru
          _
      $region56: #{tpu_custom_call.1} parent=5 // pred_fallthru
        _
    $region6: #{tpu_custom_call.1} parent=1 // loop_footer
      %s20 = sadd.s32 1, %s16
    $region7: #{tpu_custom_call.1} parent=1 // loop_footer_branch
      %15 = sbr.rel target = $region3
    $region8: #{tpu_custom_call.1} parent=1 // loop_exit
      _
    %1552 = vsyncpa [#allocation3], 1
    %s1553 = scalar_lea.sflag [#allocation3], 1
    %1554 = vsyncpa %s1553, 1

</llo_original>
